<compile_context>
chip_gen: v6e
topology: v6e:2x2x1
jax: 0.10.0
libtpu: 0.0.40
codegen_flags: <defaults>
</compile_context>

<pallas_src>
import functools

import jax
import jax.numpy as jnp
from jax.experimental import pallas as pl
from jax.experimental.pallas import tpu as pltpu

EPS = 1e-5
LANES = 128  # lane padding used ONLY for the final layer's output dim


def _round_up(n, m):
    return ((n + m - 1) // m) * m


def _default_tile_and_vmem():
    """Generation-aware (batch tile, scoped-VMEM budget). v7x has only 64 MiB/TC."""
    try:
        cap = getattr(pltpu.get_tpu_info(), "vmem_capacity_bytes", None)
    except Exception:
        cap = None
    if cap is not None and cap >= 100 * 1024 * 1024:      # v5e / v6e: 128 MiB VMEM
        return 8192, 64 * 1024 * 1024
    return 4096, 48 * 1024 * 1024                          # v7x (64 MiB) / unknown


def skip_model_kernel(x_ref, w01_ref, b01_ref, w2_ref, b2_ref, w3_ref, b3_ref,
                      o_ref, stat_ref, *, batch_size, tb, n_out):
    """Grid = (phase, batch_block).

    stat_ref rows: 0=sum1, 1=sumsq1, 2=sum2, 3=sumsq2,
                   4=mean1, 5=inv_std1, 6=mean2, 7=inv_std2
    """
    phase = pl.program_id(0)
    blk = pl.program_id(1)
    inv_b = 1.0 / float(batch_size)

    # Zero the stat accumulators at the very first grid step.
    @pl.when(jnp.logical_and(phase == 0, blk == 0))
    def _init():
        stat_ref[...] = jnp.zeros_like(stat_ref)

    x = x_ref[...]                              # [tb, n_in]  (unpadded lanes)

    def hidden1():
        # relu(h1(linear(x))) with linear+h1 pre-fused into one matmul (exact).
        h = jnp.dot(x, w01_ref[...], preferred_element_type=jnp.float32) + b01_ref[...]
        return jnp.maximum(h, 0.0)              # [tb, n_hidden]

    def hidden2():
        # relu(h2(BN1(hidden1)))
        o1 = hidden1()
        o1 = (o1 - stat_ref[4:5, :]) * stat_ref[5:6, :]
        h = jnp.dot(o1, w2_ref[...], preferred_element_type=jnp.float32) + b2_ref[...]
        return jnp.maximum(h, 0.0)              # [tb, n_hidden]

    def mask_rows(v):
        # Zero out batch-padding rows (robust jnp.where form, built only when needed).
        row = blk * tb + jax.lax.broadcasted_iota(jnp.int32, (tb, 1), 0)
        return jnp.where(row < batch_size, v, 0.0)

    # ---- phase 0: accumulate BN1 statistics over the full batch ----
    @pl.when(phase == 0)
    def _stats1():
        o1 = mask_rows(hidden1())
        stat_ref[0:1, :] += jnp.sum(o1, axis=0, keepdims=True)
        stat_ref[1:2, :] += jnp.sum(o1 * o1, axis=0, keepdims=True)

    # ---- finalize BN1 stats at the first block of phase 1 ----
    @pl.when(jnp.logical_and(phase == 1, blk == 0))
    def _finalize1():
        mean = stat_ref[0:1, :] * inv_b
        var = jnp.maximum(stat_ref[1:2, :] * inv_b - mean * mean, 0.0)
        stat_ref[4:5, :] = mean
        stat_ref[5:6, :] = jax.lax.rsqrt(var + EPS)

    # ---- phase 1: accumulate BN2 statistics over the full batch ----
    @pl.when(phase == 1)
    def _stats2():
        o2 = mask_rows(hidden2())
        stat_ref[2:3, :] += jnp.sum(o2, axis=0, keepdims=True)
        stat_ref[3:4, :] += jnp.sum(o2 * o2, axis=0, keepdims=True)

    # ---- finalize BN2 stats at the first block of phase 2 ----
    @pl.when(jnp.logical_and(phase == 2, blk == 0))
    def _finalize2():
        mean = stat_ref[2:3, :] * inv_b
        var = jnp.maximum(stat_ref[3:4, :] * inv_b - mean * mean, 0.0)
        stat_ref[6:7, :] = mean
        stat_ref[7:8, :] = jax.lax.rsqrt(var + EPS)

    # ---- phase 2: finish the network and write the compact output block ----
    @pl.when(phase == 2)
    def _final():
        o2 = hidden2()                                          # skip_out = o2
        out = (o2 - stat_ref[6:7, :]) * stat_ref[7:8, :] + o2   # BN2(o2) + skip
        logits = jnp.dot(out, w3_ref[...], preferred_element_type=jnp.float32) + b3_ref[...]
        logits = logits[:, :n_out]                              # drop lane padding
        # sigmoid = 1 / (1 + exp(-x)); exp on EUP, exact reciprocal keeps 1e-4 tol.
        o_ref[...] = pl.reciprocal(1.0 + jnp.exp(-logits))


def skip_model_forward(x, params, *, block_b=None):
    """x: [B, n_inputs] float32; params: (W0,b0,W1,b1,W2,b2,W3,b3), W as [in, out]."""
    w0, b0, w1, b1, w2, b2, w3, b3 = params
    B, n_in = x.shape
    n_hidden = w1.shape[1]
    n_out = w3.shape[1]
    assert n_out <= LANES

    # Exact host-side fusion of linear + h1 (no nonlinearity between them).
    w01 = (w0 @ w1).astype(jnp.float32)                                   # [n_in, n_hidden]
    b01 = (b0.reshape(1, -1) @ w1 + b1.reshape(1, -1)).astype(jnp.float32)  # [1, n_hidden]
    w2m = w2.astype(jnp.float32)                                          # [n_hidden, n_hidden]
    b2v = b2.reshape(1, -1).astype(jnp.float32)                           # [1, n_hidden]
    # Pad only the OUTPUT dim of the last layer to 128 lanes (K dims stay unpadded).
    w3p = jnp.zeros((n_hidden, LANES), jnp.float32).at[:, :n_out].set(w3)
    b3p = jnp.zeros((1, LANES), jnp.float32).at[:, :n_out].set(b3.reshape(1, -1))

    default_tb, vmem_limit = _default_tile_and_vmem()
    if block_b is None:
        block_b = default_tb

    # Batch tiling: TB a sublane multiple; pad batch with zero rows (masked in-kernel).
    TB = min(_round_up(block_b, 8), _round_up(B, 8))
    B_pad = _round_up(B, TB)
    x_pad = x.astype(jnp.float32)
    if B_pad != B:
        x_pad = jnp.zeros((B_pad, n_in), jnp.float32).at[:B, :].set(x_pad)

    grid = (3, B_pad // TB)  # (phase, batch block)
    kernel = functools.partial(skip_model_kernel, batch_size=B, tb=TB, n_out=n_out)

    out = pl.pallas_call(
        kernel,
        out_shape=jax.ShapeDtypeStruct((B_pad, n_out), jnp.float32),
        grid_spec=pltpu.PrefetchScalarGridSpec(
            num_scalar_prefetch=0,
            grid=grid,
            in_specs=[
                pl.BlockSpec((TB, n_in), lambda p, j: (j, 0)),              # x block (compact)
                pl.BlockSpec((n_in, n_hidden), lambda p, j: (0, 0)),        # fused W01 (resident)
                pl.BlockSpec((1, n_hidden), lambda p, j: (0, 0)),           # fused b01
                pl.BlockSpec((n_hidden, n_hidden), lambda p, j: (0, 0)),    # W2
                pl.BlockSpec((1, n_hidden), lambda p, j: (0, 0)),           # b2
                pl.BlockSpec((n_hidden, LANES), lambda p, j: (0, 0)),       # W3 (N padded)
                pl.BlockSpec((1, LANES), lambda p, j: (0, 0)),              # b3 (N padded)
            ],
            # Phase-gated writeback: block index only advances during phase 2, so the
            # output buffer is flushed to HBM exactly once per block.
            out_specs=pl.BlockSpec((TB, n_out),
                                   lambda p, j: (jnp.where(p == 2, j, 0), 0)),
            scratch_shapes=[pltpu.VMEM((8, n_hidden), jnp.float32)],        # BN stats
        ),
        compiler_params=pltpu.CompilerParams(
            # Phase axis is inherently sequential; batch axis carries cross-block
            # stat accumulation -> both "arbitrary".
            dimension_semantics=("arbitrary", "arbitrary"),
            vmem_limit_bytes=vmem_limit,
        ),
    )(x_pad, w01, b01, w2m, b2v, w3p, b3p)

    return out[:B]


def init_params(key, n_inputs, d_model, n_hidden, n_out):
    """Deterministic synthetic init (uniform fan-in scaled, like PyTorch defaults)."""

    def linear(k, fan_in, fan_out):
        kw, kb = jax.random.split(k)
        bound = 1.0 / jnp.sqrt(float(fan_in))
        w = jax.random.uniform(kw, (fan_in, fan_out), jnp.float32, -bound, bound)
        b = jax.random.uniform(kb, (1, fan_out), jnp.float32, -bound, bound)
        return w, b

    k0, k1, k2, k3 = jax.random.split(key, 4)
    w0, b0 = linear(k0, n_inputs, d_model)   # self.linear
    w1, b1 = linear(k1, d_model, n_hidden)   # self.h1
    w2, b2 = linear(k2, n_hidden, n_hidden)  # self.h2
    w3, b3 = linear(k3, n_hidden, n_out)     # self.h3
    return (w0, b0, w1, b1, w2, b2, w3, b3)


def reference_forward(x, params):
    """Pure-JAX reference matching the PyTorch forward (training-mode BN)."""
    w0, b0, w1, b1, w2, b2, w3, b3 = params
    out = x @ w0 + b0
    out = jnp.maximum(out @ w1 + b1, 0.0)
    m, v = jnp.mean(out, 0, keepdims=True), jnp.var(out, 0, keepdims=True)
    out = (out - m) / jnp.sqrt(v + EPS)
    out = jnp.maximum(out @ w2 + b2, 0.0)
    skip = out
    m, v = jnp.mean(out, 0, keepdims=True), jnp.var(out, 0, keepdims=True)
    out = (out - m) / jnp.sqrt(v + EPS)
    out = out + skip
    return jax.nn.sigmoid(out @ w3 + b3)


if __name__ == "__main__":
    B, n_inputs, d_model, n_hidden, n_out = 8, 16, 32, 32, 8

    key = jax.random.PRNGKey(0)
    kx, kp, kx2 = jax.random.split(key, 3)
    x = jax.random.normal(kx, (B, n_inputs), dtype=jnp.float32)
    params = init_params(kp, n_inputs, d_model, n_hidden, n_out)

    # Small-batch run (single batch block).
    out = jax.block_until_ready(skip_model_forward(x, params))
    ref = reference_forward(x, params)
    assert out.shape == (B, n_out)
    assert jnp.allclose(out, ref, atol=1e-4, rtol=1e-4), "mismatch vs reference (small batch)"

    # Multi-block run: exercises batch tiling, cross-block BatchNorm stats, row masking,
    # and the phase-gated output writeback.
    B2 = 200
    x2 = jax.random.normal(kx2, (B2, n_inputs), dtype=jnp.float32)
    out2 = jax.block_until_ready(skip_model_forward(x2, params, block_b=64))
    ref2 = reference_forward(x2, params)
    assert out2.shape == (B2, n_out)
    assert jnp.allclose(out2, ref2, atol=1e-4, rtol=1e-4), "mismatch vs reference (tiled batch)"

    print("KERNEL_OK")
</pallas_src>

<mosaic_0001>
module attributes {stable_mosaic.version = 11 : i64} {
  func.func @skip_model_kernel(%arg0: i32, %arg1: i32, %arg2: memref<8x16xf32, #tpu.memory_space<vmem>>, %arg3: memref<16x32xf32, #tpu.memory_space<vmem>>, %arg4: memref<1x32xf32, #tpu.memory_space<vmem>>, %arg5: memref<32x32xf32, #tpu.memory_space<vmem>>, %arg6: memref<1x32xf32, #tpu.memory_space<vmem>>, %arg7: memref<32x128xf32, #tpu.memory_space<vmem>>, %arg8: memref<1x128xf32, #tpu.memory_space<vmem>>, %arg9: memref<8x8xf32, #tpu.memory_space<vmem>>, %arg10: memref<8x32xf32, #tpu.memory_space<vmem>>) attributes {dimension_semantics = [#tpu.dimension_semantics<arbitrary>, #tpu.dimension_semantics<arbitrary>], iteration_bounds = array<i64: 3, 1>, scalar_prefetch = 0 : i64, scratch_operands = 1 : i64, tpu.core_type = #tpu.core_type<tc>, window_params = [{transform_indices = @transform_0, window_bounds = array<i64: 8, 16>}, {pipeline_mode = #tpu.pipeline_mode<synchronous>, transform_indices = @transform_1, window_bounds = array<i64: 16, 32>}, {pipeline_mode = #tpu.pipeline_mode<synchronous>, transform_indices = @transform_2, window_bounds = array<i64: 1, 32>}, {pipeline_mode = #tpu.pipeline_mode<synchronous>, transform_indices = @transform_3, window_bounds = array<i64: 32, 32>}, {pipeline_mode = #tpu.pipeline_mode<synchronous>, transform_indices = @transform_4, window_bounds = array<i64: 1, 32>}, {pipeline_mode = #tpu.pipeline_mode<synchronous>, transform_indices = @transform_5, window_bounds = array<i64: 32, 128>}, {pipeline_mode = #tpu.pipeline_mode<synchronous>, transform_indices = @transform_6, window_bounds = array<i64: 1, 128>}, {transform_indices = @transform_7, window_bounds = array<i64: 8, 8>}]} {
    %c0_i32 = arith.constant 0 : i32
    %0 = arith.cmpi eq, %arg0, %c0_i32 : i32
    %c0_i32_0 = arith.constant 0 : i32
    %1 = arith.cmpi eq, %arg1, %c0_i32_0 : i32
    %2 = arith.andi %0, %1 : i1
    %3 = arith.extui %2 : i1 to i32
    %c0_i32_1 = arith.constant 0 : i32
    %4 = arith.cmpi ne, %3, %c0_i32_1 : i32
    scf.if %4 {
      %cst = arith.constant 0.000000e+00 : f32
      %25 = vector.broadcast %cst : f32 to vector<8x32xf32>
      %c0_13 = arith.constant 0 : index
      %c0_14 = arith.constant 0 : index
      %26 = vector.load %arg10[%c0_13, %c0_14] : memref<8x32xf32, #tpu.memory_space<vmem>>, vector<8x32xf32>
      tpu.vector_store %arg10[%c0_13, %c0_14], %25 {strides = array<i32>} : memref<8x32xf32, #tpu.memory_space<vmem>>, vector<8x32xf32>,
    } else {
    }
    %c0 = arith.constant 0 : index
    %c0_2 = arith.constant 0 : index
    %5 = vector.load %arg2[%c0, %c0_2] : memref<8x16xf32, #tpu.memory_space<vmem>>, vector<8x16xf32>
    %c0_i32_3 = arith.constant 0 : i32
    %6 = arith.cmpi eq, %arg0, %c0_i32_3 : i32
    %7 = arith.extui %6 : i1 to i32
    %c0_i32_4 = arith.constant 0 : i32
    %8 = arith.cmpi ne, %7, %c0_i32_4 : i32
    scf.if %8 {
      %c0_13 = arith.constant 0 : index
      %c0_14 = arith.constant 0 : index
      %25 = vector.load %arg3[%c0_13, %c0_14] : memref<16x32xf32, #tpu.memory_space<vmem>>, vector<16x32xf32>
      %cst = arith.constant dense<0.000000e+00> : vector<8x32xf32>
      %26 = tpu.matmul %5, %25, %cst {dimension_numbers = #tpu.dot_dimension_numbers<[1], [0], [0], [1], [0, 0, 1, 1], [], []>} : vector<8x16xf32>, vector<16x32xf32>, vector<8x32xf32> -> vector<8x32xf32>
      %c0_15 = arith.constant 0 : index
      %c0_16 = arith.constant 0 : index
      %27 = vector.load %arg4[%c0_15, %c0_16] : memref<1x32xf32, #tpu.memory_space<vmem>>, vector<1x32xf32>
      %28 = vector.broadcast %27 : vector<1x32xf32> to vector<8x32xf32>
      %29 = arith.addf %26, %28 : vector<8x32xf32>
      %cst_17 = arith.constant 0.000000e+00 : f32
      %30 = vector.broadcast %cst_17 : f32 to vector<8x32xf32>
      %31 = arith.maximumf %29, %30 : vector<8x32xf32>
      %c8_i32 = arith.constant 8 : i32
      %32 = arith.muli %arg1, %c8_i32 : i32
      %33 = tpu.iota {dimensions = array<i32: 0>} : vector<8x1xi32>
      %34 = vector.broadcast %32 : i32 to vector<8x1xi32>
      %35 = arith.addi %34, %33 : vector<8x1xi32>
      %c8_i32_18 = arith.constant 8 : i32
      %36 = vector.broadcast %c8_i32_18 : i32 to vector<8x1xi32>
      %37 = arith.cmpi slt, %35, %36 : vector<8x1xi32>
      %cst_19 = arith.constant 0.000000e+00 : f32
      %38 = vector.shape_cast %37 : vector<8x1xi1> to vector<8x1xi1>
      %39 = vector.broadcast %38 : vector<8x1xi1> to vector<8x32xi1>
      %40 = vector.broadcast %cst_19 : f32 to vector<8x32xf32>
      %41 = arith.select %39, %31, %40 : vector<8x32xi1>, vector<8x32xf32>
      %c0_20 = arith.constant 0 : index
      %c0_21 = arith.constant 0 : index
      %42 = vector.load %arg10[%c0_20, %c0_21] : memref<8x32xf32, #tpu.memory_space<vmem>>, vector<1x32xf32>
      %cst_22 = arith.constant dense<0.000000e+00> : vector<32xf32>
      %43 = vector.multi_reduction <add>, %41, %cst_22 [0] : vector<8x32xf32> to vector<32xf32>
      %44 = vector.shape_cast %43 : vector<32xf32> to vector<1x32xf32>
      %45 = arith.addf %42, %44 : vector<1x32xf32>
      %c0_23 = arith.constant 0 : index
      %c0_24 = arith.constant 0 : index
      %46 = vector.load %arg10[%c0_23, %c0_24] : memref<8x32xf32, #tpu.memory_space<vmem>>, vector<1x32xf32>
      tpu.vector_store %arg10[%c0_23, %c0_24], %45 {strides = array<i32>} : memref<8x32xf32, #tpu.memory_space<vmem>>, vector<1x32xf32>,
      %c1 = arith.constant 1 : index
      %c0_25 = arith.constant 0 : index
      %47 = vector.load %arg10[%c1, %c0_25] : memref<8x32xf32, #tpu.memory_space<vmem>>, vector<1x32xf32>
      %48 = arith.mulf %41, %41 : vector<8x32xf32>
      %cst_26 = arith.constant dense<0.000000e+00> : vector<32xf32>
      %49 = vector.multi_reduction <add>, %48, %cst_26 [0] : vector<8x32xf32> to vector<32xf32>
      %50 = vector.shape_cast %49 : vector<32xf32> to vector<1x32xf32>
      %51 = arith.addf %47, %50 : vector<1x32xf32>
      %c1_27 = arith.constant 1 : index
      %c0_28 = arith.constant 0 : index
      %52 = vector.load %arg10[%c1_27, %c0_28] : memref<8x32xf32, #tpu.memory_space<vmem>>, vector<1x32xf32>
      tpu.vector_store %arg10[%c1_27, %c0_28], %51 {strides = array<i32>} : memref<8x32xf32, #tpu.memory_space<vmem>>, vector<1x32xf32>,
    } else {
    }
    %c1_i32 = arith.constant 1 : i32
    %9 = arith.cmpi eq, %arg0, %c1_i32 : i32
    %c0_i32_5 = arith.constant 0 : i32
    %10 = arith.cmpi eq, %arg1, %c0_i32_5 : i32
    %11 = arith.andi %9, %10 : i1
    %12 = arith.extui %11 : i1 to i32
    %c0_i32_6 = arith.constant 0 : i32
    %13 = arith.cmpi ne, %12, %c0_i32_6 : i32
    scf.if %13 {
      %c0_13 = arith.constant 0 : index
      %c0_14 = arith.constant 0 : index
      %25 = vector.load %arg10[%c0_13, %c0_14] : memref<8x32xf32, #tpu.memory_space<vmem>>, vector<1x32xf32>
      %cst = arith.constant 1.250000e-01 : f32
      %26 = vector.broadcast %cst : f32 to vector<1x32xf32>
      %27 = arith.mulf %25, %26 : vector<1x32xf32>
      %c1 = arith.constant 1 : index
      %c0_15 = arith.constant 0 : index
      %28 = vector.load %arg10[%c1, %c0_15] : memref<8x32xf32, #tpu.memory_space<vmem>>, vector<1x32xf32>
      %cst_16 = arith.constant 1.250000e-01 : f32
      %29 = vector.broadcast %cst_16 : f32 to vector<1x32xf32>
      %30 = arith.mulf %28, %29 : vector<1x32xf32>
      %31 = arith.mulf %27, %27 : vector<1x32xf32>
      %32 = arith.subf %30, %31 : vector<1x32xf32>
      %cst_17 = arith.constant 0.000000e+00 : f32
      %33 = vector.broadcast %cst_17 : f32 to vector<1x32xf32>
      %34 = arith.maximumf %32, %33 : vector<1x32xf32>
      %c4 = arith.constant 4 : index
      %c0_18 = arith.constant 0 : index
      %35 = vector.load %arg10[%c4, %c0_18] : memref<8x32xf32, #tpu.memory_space<vmem>>, vector<1x32xf32>
      tpu.vector_store %arg10[%c4, %c0_18], %27 {strides = array<i32>} : memref<8x32xf32, #tpu.memory_space<vmem>>, vector<1x32xf32>,
      %cst_19 = arith.constant 9.99999974E-6 : f32
      %36 = vector.broadcast %cst_19 : f32 to vector<1x32xf32>
      %37 = arith.addf %34, %36 : vector<1x32xf32>
      %38 = math.rsqrt %37 : vector<1x32xf32>
      %c5 = arith.constant 5 : index
      %c0_20 = arith.constant 0 : index
      %39 = vector.load %arg10[%c5, %c0_20] : memref<8x32xf32, #tpu.memory_space<vmem>>, vector<1x32xf32>
      tpu.vector_store %arg10[%c5, %c0_20], %38 {strides = array<i32>} : memref<8x32xf32, #tpu.memory_space<vmem>>, vector<1x32xf32>,
    } else {
    }
    %c1_i32_7 = arith.constant 1 : i32
    %14 = arith.cmpi eq, %arg0, %c1_i32_7 : i32
    %15 = arith.extui %14 : i1 to i32
    %c0_i32_8 = arith.constant 0 : i32
    %16 = arith.cmpi ne, %15, %c0_i32_8 : i32
    scf.if %16 {
      %c0_13 = arith.constant 0 : index
      %c0_14 = arith.constant 0 : index
      %25 = vector.load %arg3[%c0_13, %c0_14] : memref<16x32xf32, #tpu.memory_space<vmem>>, vector<16x32xf32>
      %cst = arith.constant dense<0.000000e+00> : vector<8x32xf32>
      %26 = tpu.matmul %5, %25, %cst {dimension_numbers = #tpu.dot_dimension_numbers<[1], [0], [0], [1], [0, 0, 1, 1], [], []>} : vector<8x16xf32>, vector<16x32xf32>, vector<8x32xf32> -> vector<8x32xf32>
      %c0_15 = arith.constant 0 : index
      %c0_16 = arith.constant 0 : index
      %27 = vector.load %arg4[%c0_15, %c0_16] : memref<1x32xf32, #tpu.memory_space<vmem>>, vector<1x32xf32>
      %28 = vector.broadcast %27 : vector<1x32xf32> to vector<8x32xf32>
      %29 = arith.addf %26, %28 : vector<8x32xf32>
      %cst_17 = arith.constant 0.000000e+00 : f32
      %30 = vector.broadcast %cst_17 : f32 to vector<8x32xf32>
      %31 = arith.maximumf %29, %30 : vector<8x32xf32>
      %c4 = arith.constant 4 : index
      %c0_18 = arith.constant 0 : index
      %32 = vector.load %arg10[%c4, %c0_18] : memref<8x32xf32, #tpu.memory_space<vmem>>, vector<1x32xf32>
      %33 = vector.broadcast %32 : vector<1x32xf32> to vector<8x32xf32>
      %34 = arith.subf %31, %33 : vector<8x32xf32>
      %c5 = arith.constant 5 : index
      %c0_19 = arith.constant 0 : index
      %35 = vector.load %arg10[%c5, %c0_19] : memref<8x32xf32, #tpu.memory_space<vmem>>, vector<1x32xf32>
      %36 = vector.broadcast %35 : vector<1x32xf32> to vector<8x32xf32>
      %37 = arith.mulf %34, %36 : vector<8x32xf32>
      %c0_20 = arith.constant 0 : index
      %c0_21 = arith.constant 0 : index
      %38 = vector.load %arg5[%c0_20, %c0_21] : memref<32x32xf32, #tpu.memory_space<vmem>>, vector<32x32xf32>
      %cst_22 = arith.constant dense<0.000000e+00> : vector<8x32xf32>
      %39 = tpu.matmul %37, %38, %cst_22 {dimension_numbers = #tpu.dot_dimension_numbers<[1], [0], [0], [1], [0, 0, 1, 1], [], []>} : vector<8x32xf32>, vector<32x32xf32>, vector<8x32xf32> -> vector<8x32xf32>
      %c0_23 = arith.constant 0 : index
      %c0_24 = arith.constant 0 : index
      %40 = vector.load %arg6[%c0_23, %c0_24] : memref<1x32xf32, #tpu.memory_space<vmem>>, vector<1x32xf32>
      %41 = vector.broadcast %40 : vector<1x32xf32> to vector<8x32xf32>
      %42 = arith.addf %39, %41 : vector<8x32xf32>
      %cst_25 = arith.constant 0.000000e+00 : f32
      %43 = vector.broadcast %cst_25 : f32 to vector<8x32xf32>
      %44 = arith.maximumf %42, %43 : vector<8x32xf32>
      %c8_i32 = arith.constant 8 : i32
      %45 = arith.muli %arg1, %c8_i32 : i32
      %46 = tpu.iota {dimensions = array<i32: 0>} : vector<8x1xi32>
      %47 = vector.broadcast %45 : i32 to vector<8x1xi32>
      %48 = arith.addi %47, %46 : vector<8x1xi32>
      %c8_i32_26 = arith.constant 8 : i32
      %49 = vector.broadcast %c8_i32_26 : i32 to vector<8x1xi32>
      %50 = arith.cmpi slt, %48, %49 : vector<8x1xi32>
      %cst_27 = arith.constant 0.000000e+00 : f32
      %51 = vector.shape_cast %50 : vector<8x1xi1> to vector<8x1xi1>
      %52 = vector.broadcast %51 : vector<8x1xi1> to vector<8x32xi1>
      %53 = vector.broadcast %cst_27 : f32 to vector<8x32xf32>
      %54 = arith.select %52, %44, %53 : vector<8x32xi1>, vector<8x32xf32>
      %c2 = arith.constant 2 : index
      %c0_28 = arith.constant 0 : index
      %55 = vector.load %arg10[%c2, %c0_28] : memref<8x32xf32, #tpu.memory_space<vmem>>, vector<1x32xf32>
      %cst_29 = arith.constant dense<0.000000e+00> : vector<32xf32>
      %56 = vector.multi_reduction <add>, %54, %cst_29 [0] : vector<8x32xf32> to vector<32xf32>
      %57 = vector.shape_cast %56 : vector<32xf32> to vector<1x32xf32>
      %58 = arith.addf %55, %57 : vector<1x32xf32>
      %c2_30 = arith.constant 2 : index
      %c0_31 = arith.constant 0 : index
      %59 = vector.load %arg10[%c2_30, %c0_31] : memref<8x32xf32, #tpu.memory_space<vmem>>, vector<1x32xf32>
      tpu.vector_store %arg10[%c2_30, %c0_31], %58 {strides = array<i32>} : memref<8x32xf32, #tpu.memory_space<vmem>>, vector<1x32xf32>,
      %c3 = arith.constant 3 : index
      %c0_32 = arith.constant 0 : index
      %60 = vector.load %arg10[%c3, %c0_32] : memref<8x32xf32, #tpu.memory_space<vmem>>, vector<1x32xf32>
      %61 = arith.mulf %54, %54 : vector<8x32xf32>
      %cst_33 = arith.constant dense<0.000000e+00> : vector<32xf32>
      %62 = vector.multi_reduction <add>, %61, %cst_33 [0] : vector<8x32xf32> to vector<32xf32>
      %63 = vector.shape_cast %62 : vector<32xf32> to vector<1x32xf32>
      %64 = arith.addf %60, %63 : vector<1x32xf32>
      %c3_34 = arith.constant 3 : index
      %c0_35 = arith.constant 0 : index
      %65 = vector.load %arg10[%c3_34, %c0_35] : memref<8x32xf32, #tpu.memory_space<vmem>>, vector<1x32xf32>
      tpu.vector_store %arg10[%c3_34, %c0_35], %64 {strides = array<i32>} : memref<8x32xf32, #tpu.memory_space<vmem>>, vector<1x32xf32>,
    } else {
    }
    %c2_i32 = arith.constant 2 : i32
    %17 = arith.cmpi eq, %arg0, %c2_i32 : i32
    %c0_i32_9 = arith.constant 0 : i32
    %18 = arith.cmpi eq, %arg1, %c0_i32_9 : i32
    %19 = arith.andi %17, %18 : i1
    %20 = arith.extui %19 : i1 to i32
    %c0_i32_10 = arith.constant 0 : i32
    %21 = arith.cmpi ne, %20, %c0_i32_10 : i32
    scf.if %21 {
      %c2 = arith.constant 2 : index
      %c0_13 = arith.constant 0 : index
      %25 = vector.load %arg10[%c2, %c0_13] : memref<8x32xf32, #tpu.memory_space<vmem>>, vector<1x32xf32>
      %cst = arith.constant 1.250000e-01 : f32
      %26 = vector.broadcast %cst : f32 to vector<1x32xf32>
      %27 = arith.mulf %25, %26 : vector<1x32xf32>
      %c3 = arith.constant 3 : index
      %c0_14 = arith.constant 0 : index
      %28 = vector.load %arg10[%c3, %c0_14] : memref<8x32xf32, #tpu.memory_space<vmem>>, vector<1x32xf32>
      %cst_15 = arith.constant 1.250000e-01 : f32
      %29 = vector.broadcast %cst_15 : f32 to vector<1x32xf32>
      %30 = arith.mulf %28, %29 : vector<1x32xf32>
      %31 = arith.mulf %27, %27 : vector<1x32xf32>
      %32 = arith.subf %30, %31 : vector<1x32xf32>
      %cst_16 = arith.constant 0.000000e+00 : f32
      %33 = vector.broadcast %cst_16 : f32 to vector<1x32xf32>
      %34 = arith.maximumf %32, %33 : vector<1x32xf32>
      %c6 = arith.constant 6 : index
      %c0_17 = arith.constant 0 : index
      %35 = vector.load %arg10[%c6, %c0_17] : memref<8x32xf32, #tpu.memory_space<vmem>>, vector<1x32xf32>
      tpu.vector_store %arg10[%c6, %c0_17], %27 {strides = array<i32>} : memref<8x32xf32, #tpu.memory_space<vmem>>, vector<1x32xf32>,
      %cst_18 = arith.constant 9.99999974E-6 : f32
      %36 = vector.broadcast %cst_18 : f32 to vector<1x32xf32>
      %37 = arith.addf %34, %36 : vector<1x32xf32>
      %38 = math.rsqrt %37 : vector<1x32xf32>
      %c7 = arith.constant 7 : index
      %c0_19 = arith.constant 0 : index
      %39 = vector.load %arg10[%c7, %c0_19] : memref<8x32xf32, #tpu.memory_space<vmem>>, vector<1x32xf32>
      tpu.vector_store %arg10[%c7, %c0_19], %38 {strides = array<i32>} : memref<8x32xf32, #tpu.memory_space<vmem>>, vector<1x32xf32>,
    } else {
    }
    %c2_i32_11 = arith.constant 2 : i32
    %22 = arith.cmpi eq, %arg0, %c2_i32_11 : i32
    %23 = arith.extui %22 : i1 to i32
    %c0_i32_12 = arith.constant 0 : i32
    %24 = arith.cmpi ne, %23, %c0_i32_12 : i32
    scf.if %24 {
      %c0_13 = arith.constant 0 : index
      %c0_14 = arith.constant 0 : index
      %25 = vector.load %arg3[%c0_13, %c0_14] : memref<16x32xf32, #tpu.memory_space<vmem>>, vector<16x32xf32>
      %cst = arith.constant dense<0.000000e+00> : vector<8x32xf32>
      %26 = tpu.matmul %5, %25, %cst {dimension_numbers = #tpu.dot_dimension_numbers<[1], [0], [0], [1], [0, 0, 1, 1], [], []>} : vector<8x16xf32>, vector<16x32xf32>, vector<8x32xf32> -> vector<8x32xf32>
      %c0_15 = arith.constant 0 : index
      %c0_16 = arith.constant 0 : index
      %27 = vector.load %arg4[%c0_15, %c0_16] : memref<1x32xf32, #tpu.memory_space<vmem>>, vector<1x32xf32>
      %28 = vector.broadcast %27 : vector<1x32xf32> to vector<8x32xf32>
      %29 = arith.addf %26, %28 : vector<8x32xf32>
      %cst_17 = arith.constant 0.000000e+00 : f32
      %30 = vector.broadcast %cst_17 : f32 to vector<8x32xf32>
      %31 = arith.maximumf %29, %30 : vector<8x32xf32>
      %c4 = arith.constant 4 : index
      %c0_18 = arith.constant 0 : index
      %32 = vector.load %arg10[%c4, %c0_18] : memref<8x32xf32, #tpu.memory_space<vmem>>, vector<1x32xf32>
      %33 = vector.broadcast %32 : vector<1x32xf32> to vector<8x32xf32>
      %34 = arith.subf %31, %33 : vector<8x32xf32>
      %c5 = arith.constant 5 : index
      %c0_19 = arith.constant 0 : index
      %35 = vector.load %arg10[%c5, %c0_19] : memref<8x32xf32, #tpu.memory_space<vmem>>, vector<1x32xf32>
      %36 = vector.broadcast %35 : vector<1x32xf32> to vector<8x32xf32>
      %37 = arith.mulf %34, %36 : vector<8x32xf32>
      %c0_20 = arith.constant 0 : index
      %c0_21 = arith.constant 0 : index
      %38 = vector.load %arg5[%c0_20, %c0_21] : memref<32x32xf32, #tpu.memory_space<vmem>>, vector<32x32xf32>
      %cst_22 = arith.constant dense<0.000000e+00> : vector<8x32xf32>
      %39 = tpu.matmul %37, %38, %cst_22 {dimension_numbers = #tpu.dot_dimension_numbers<[1], [0], [0], [1], [0, 0, 1, 1], [], []>} : vector<8x32xf32>, vector<32x32xf32>, vector<8x32xf32> -> vector<8x32xf32>
      %c0_23 = arith.constant 0 : index
      %c0_24 = arith.constant 0 : index
      %40 = vector.load %arg6[%c0_23, %c0_24] : memref<1x32xf32, #tpu.memory_space<vmem>>, vector<1x32xf32>
      %41 = vector.broadcast %40 : vector<1x32xf32> to vector<8x32xf32>
      %42 = arith.addf %39, %41 : vector<8x32xf32>
      %cst_25 = arith.constant 0.000000e+00 : f32
      %43 = vector.broadcast %cst_25 : f32 to vector<8x32xf32>
      %44 = arith.maximumf %42, %43 : vector<8x32xf32>
      %c6 = arith.constant 6 : index
      %c0_26 = arith.constant 0 : index
      %45 = vector.load %arg10[%c6, %c0_26] : memref<8x32xf32, #tpu.memory_space<vmem>>, vector<1x32xf32>
      %46 = vector.broadcast %45 : vector<1x32xf32> to vector<8x32xf32>
      %47 = arith.subf %44, %46 : vector<8x32xf32>
      %c7 = arith.constant 7 : index
      %c0_27 = arith.constant 0 : index
      %48 = vector.load %arg10[%c7, %c0_27] : memref<8x32xf32, #tpu.memory_space<vmem>>, vector<1x32xf32>
      %49 = vector.broadcast %48 : vector<1x32xf32> to vector<8x32xf32>
      %50 = arith.mulf %47, %49 : vector<8x32xf32>
      %51 = arith.addf %50, %44 : vector<8x32xf32>
      %c0_28 = arith.constant 0 : index
      %c0_29 = arith.constant 0 : index
      %52 = vector.load %arg7[%c0_28, %c0_29] : memref<32x128xf32, #tpu.memory_space<vmem>>, vector<32x128xf32>
      %cst_30 = arith.constant dense<0.000000e+00> : vector<8x128xf32>
      %53 = tpu.matmul %51, %52, %cst_30 {dimension_numbers = #tpu.dot_dimension_numbers<[1], [0], [0], [1], [0, 0, 1, 1], [], []>} : vector<8x32xf32>, vector<32x128xf32>, vector<8x128xf32> -> vector<8x128xf32>
      %c0_31 = arith.constant 0 : index
      %c0_32 = arith.constant 0 : index
      %54 = vector.load %arg8[%c0_31, %c0_32] : memref<1x128xf32, #tpu.memory_space<vmem>>, vector<1x128xf32>
      %55 = vector.broadcast %54 : vector<1x128xf32> to vector<8x128xf32>
      %56 = arith.addf %53, %55 : vector<8x128xf32>
      %57 = vector.extract_strided_slice %56 {offsets = [0, 0], sizes = [8, 8], strides = [1, 1]} : vector<8x128xf32> to vector<8x8xf32>
      %cst_33 = arith.constant 0.000000e+00 : f32
      %58 = vector.broadcast %cst_33 : f32 to vector<8x8xf32>
      %59 = arith.subf %58, %57 : vector<8x8xf32>
      %60 = math.exp %59 : vector<8x8xf32>
      %cst_34 = arith.constant 1.000000e+00 : f32
      %61 = vector.broadcast %cst_34 : f32 to vector<8x8xf32>
      %62 = arith.addf %61, %60 : vector<8x8xf32>
      %63 = tpu.reciprocal %62 : vector<8x8xf32> -> vector<8x8xf32>
      %c0_35 = arith.constant 0 : index
      %c0_36 = arith.constant 0 : index
      %64 = vector.load %arg9[%c0_35, %c0_36] : memref<8x8xf32, #tpu.memory_space<vmem>>, vector<8x8xf32>
      tpu.vector_store %arg9[%c0_35, %c0_36], %63 {strides = array<i32>} : memref<8x8xf32, #tpu.memory_space<vmem>>, vector<8x8xf32>,
    } else {
    }
    return
  }
  func.func @transform_0(%arg0: i32, %arg1: i32) -> (i32, i32) {
    %c0_i32 = arith.constant 0 : i32
    %c0_i32_0 = arith.constant 0 : i32
    return %arg1, %c0_i32 : i32, i32
  }
  func.func @transform_1(%arg0: i32, %arg1: i32) -> (i32, i32) {
    %c0_i32 = arith.constant 0 : i32
    %c0_i32_0 = arith.constant 0 : i32
    %c0_i32_1 = arith.constant 0 : i32
    return %c0_i32, %c0_i32_0 : i32, i32
  }
  func.func @transform_2(%arg0: i32, %arg1: i32) -> (i32, i32) {
    %c0_i32 = arith.constant 0 : i32
    %c0_i32_0 = arith.constant 0 : i32
    %c0_i32_1 = arith.constant 0 : i32
    return %c0_i32, %c0_i32_0 : i32, i32
  }
  func.func @transform_3(%arg0: i32, %arg1: i32) -> (i32, i32) {
    %c0_i32 = arith.constant 0 : i32
    %c0_i32_0 = arith.constant 0 : i32
    %c0_i32_1 = arith.constant 0 : i32
    return %c0_i32, %c0_i32_0 : i32, i32
  }
  func.func @transform_4(%arg0: i32, %arg1: i32) -> (i32, i32) {
    %c0_i32 = arith.constant 0 : i32
    %c0_i32_0 = arith.constant 0 : i32
    %c0_i32_1 = arith.constant 0 : i32
    return %c0_i32, %c0_i32_0 : i32, i32
  }
  func.func @transform_5(%arg0: i32, %arg1: i32) -> (i32, i32) {
    %c0_i32 = arith.constant 0 : i32
    %c0_i32_0 = arith.constant 0 : i32
    %c0_i32_1 = arith.constant 0 : i32
    return %c0_i32, %c0_i32_0 : i32, i32
  }
  func.func @transform_6(%arg0: i32, %arg1: i32) -> (i32, i32) {
    %c0_i32 = arith.constant 0 : i32
    %c0_i32_0 = arith.constant 0 : i32
    %c0_i32_1 = arith.constant 0 : i32
    return %c0_i32, %c0_i32_0 : i32, i32
  }
  func.func @transform_7(%arg0: i32, %arg1: i32) -> (i32, i32) {
    %c2_i32 = arith.constant 2 : i32
    %0 = arith.cmpi eq, %arg0, %c2_i32 : i32
    %c0_i32 = arith.constant 0 : i32
    %1 = arith.select %0, %arg1, %c0_i32 : i32
    %c0_i32_0 = arith.constant 0 : i32
    %c0_i32_1 = arith.constant 0 : i32
    return %1, %c0_i32_0 : i32, i32
  }
}

</mosaic_0001>

<llo_original>
// kernel: tpu_custom_call.1
$region0: #{tpu_custom_call.1}
  #allocation0 [shape = 'u32[]', space=smem, size = 0x4, offset = 0x4, fixed_abs, tag = 'smem constant byte address 0x4 - core index']
  #allocation1 [shape = 'u32[144,128]{1,0:T(1,128)}', space=vmem, size = 0x12000, scoped, tag = 'internal scratch']
  #allocation2 [shape = 'f32[8,32]{1,0:T(8,128)}', space=vmem, size = 0x1000, scoped, tag = 'scratch operand']
  %s0 = inlined_call_operand.hbm [shape: f32[8,16], index: 0, kind: input, shape index: {}]
  %s1 = inlined_call_operand.hbm [shape: f32[16,32], index: 1, kind: input, shape index: {}]
  %s2 = inlined_call_operand.vmem [shape: f32[1,32], index: 2, kind: input, shape index: {}]
  %s3 = inlined_call_operand.hbm [shape: f32[32,32], index: 3, kind: input, shape index: {}]
  %s4 = inlined_call_operand.vmem [shape: f32[1,32], index: 4, kind: input, shape index: {}]
  %s5 = inlined_call_operand.hbm [shape: f32[32,128], index: 5, kind: input, shape index: {}]
  %s6 = inlined_call_operand.vmem [shape: f32[1,128], index: 6, kind: input, shape index: {}]
  %s7 = inlined_call_operand.hbm [shape: f32[8,8], index: 7, kind: output, shape index: {}]
  %s8 = sld [smem:[#allocation0]]
  $region101: #{tpu_custom_call.1} parent=0
    _
  %s10 = ssub.s32 1, %s8
  %s11 = scalar_select 0, %s10, %s8
  $region1: #{tpu_custom_call.1} parent=0
    #allocation3 [shape = 'u8[4096]{0}', space=vmem, size = 0x1000, scoped, tag = 'input window, operand 0, single buffered']
    #allocation4 [shape = 's32[2]{0}', space=sflag, size = 0x8, scoped, tag = 'scoped memory for tpu_custom_call.1']
    #allocation5 [shape = 's32[2]{0}', space=sflag, size = 0x8, scoped, tag = 'scoped memory for tpu_custom_call.1']
    #allocation6 [shape = 'u8[8192]{0}', space=vmem, size = 0x2000, scoped, tag = 'input window, operand 1, single buffered']
    #allocation7 [shape = 's32[1]{0}', space=sflag, size = 0x4, scoped, tag = 'scoped memory for tpu_custom_call.1']
    #allocation8 [shape = 'u8[16384]{0}', space=vmem, size = 0x4000, scoped, tag = 'input window, operand 3, single buffered']
    #allocation9 [shape = 'u8[16384]{0}', space=vmem, size = 0x4000, scoped, tag = 'input window, operand 5, single buffered']
    #allocation10 [shape = 's32[1]{0}', space=sflag, size = 0x4, scoped, tag = 'scoped memory for tpu_custom_call.1']
    #allocation11 [shape = 'u8[8192]{0}', space=vmem, size = 0x2000, scoped, tag = 'output window, operand 0']
    %12 = vsyncpa [#allocation4], 0
    %13 = vsyncpa [#allocation7], 0
    %14 = vsyncpa [#allocation10], 0
    %15 = vsyncpa [#allocation5], 0
    %s16 = scalar_lea.sflag [#allocation5], 1
    %17 = vsyncpa %s16, 0
    loop: start=0, step=1, limit=5
    $region2: #{tpu_custom_call.1} parent=1 // loop_pre_header
      _
    $region3: #{tpu_custom_call.1} parent=1 // loop_header
      %s19 = sphi 0, %s23
      %p20 = scmp.ge.s32.totalorder %s19, 5
      %s26 = sphi 0, %s38
      %s27 = sphi 0, %s34
      %s28 = sphi 0, %s26
      %s29 = sphi 0, %s27
      %s30 = sphi 0, %s28
      %s31 = sphi 0, %s29
      %s41 = sphi 0, %s43
      %s44 = sphi 0, %s41
      %s45 = sphi 0, %s44
      %s61 = sphi 0, %s45
      %s65 = sphi 0, %s65
      %s67 = sphi 0, %s65
      %s68 = sphi 0, %s67
      %s82 = sphi 0, %s68
      %s86 = sphi 0, %s86
      %s88 = sphi 0, %s86
      %s89 = sphi 0, %s88
      %s103 = sphi 0, %s89
      %s107 = sphi 0, %s107
      %s109 = sphi 0, %s107
      %s110 = sphi 0, %s109
      %s124 = sphi 0, %s110
      %s128 = sphi 0, %s128
      %s130 = sphi 0, %s128
      %s131 = sphi 0, %s130
      %s145 = sphi 0, %s131
      %s149 = sphi 0, %s149
      %s151 = sphi 0, %s149
      %s152 = sphi 0, %s151
      %s166 = sphi 0, %s152
      %s170 = sphi 0, %s170
      %s172 = sphi 0, %s170
      %s173 = sphi 0, %s172
      %s187 = sphi 0, %s173
      %s197 = sphi 0, %s199
      %s200 = sphi 0, %s197
      %s201 = sphi 0, %s200
      %s217 = sphi 0, %s201
    $region4: #{tpu_custom_call.1} parent=1 // loop_header_branch
      %22 = sbr.rel (%p20) target = $region8
    $region5: #{tpu_custom_call.1} parent=1 // loop_body
      %s24 = ssub.s32 %s19, 1
      %s25 = ssub.s32 %s19, 2
      %s32 = sadd.s32 1, %s27
      %p33 = scmp.ge.s32.totalorder %s32, 1
      %s34 = scalar_select %p33, 0, %s32
      %s35 = sadd.s32 1, %s26
      %s36 = scalar_select %p33, %s35, %s26
      %p37 = scmp.ge.s32.totalorder %s36, 3
      %s38 = scalar_select %p37, 0, %s36
      %s39 = ssub.s32 %s27, %s34
      %p40 = scmp.eq.s32.totalorder %s39, 0
      %s42 = sadd.s32 %s41, 1
      %s43 = scalar_select %p40, %s41, %s42
      %p46 = pneg %p40
      %p47 = scmp.eq.s32.totalorder %s19, 2
      %p48 = por %p46, %p47
      %p49 = scmp.ne.s32.totalorder %s41, %s44
      %p50 = scmp.eq.s32.totalorder %s19, 0
      %p51 = por %p49, %p50
      %p52 = scmp.ne.s32.totalorder %s41, %s44
      %p53 = scmp.eq.s32.totalorder %s24, 2
      %p54 = por %p52, %p53
      %p55 = scmp.ne.s32.totalorder %s44, %s45
      %p56 = scmp.eq.s32.totalorder %s24, 0
      %p57 = por %p55, %p56
      %p58 = scmp.ne.s32.totalorder %s44, %s45
      %p59 = scmp.eq.s32.totalorder %s25, 2
      %p60 = por %p58, %p59
      %p62 = scmp.ne.s32.totalorder %s45, %s61
      %p63 = scmp.eq.s32.totalorder %s25, 0
      %p64 = por %p62, %p63
      %s66 = sadd.s32 %s65, 1
      %p69 = scmp.eq.s32.totalorder %s19, 2
      %p70 = scmp.ne.s32.totalorder %s65, %s67
      %p71 = scmp.eq.s32.totalorder %s19, 0
      %p72 = por %p70, %p71
      %p73 = scmp.ne.s32.totalorder %s65, %s67
      %p74 = scmp.eq.s32.totalorder %s24, 2
      %p75 = por %p73, %p74
      %p76 = scmp.ne.s32.totalorder %s67, %s68
      %p77 = scmp.eq.s32.totalorder %s24, 0
      %p78 = por %p76, %p77
      %p79 = scmp.ne.s32.totalorder %s67, %s68
      %p80 = scmp.eq.s32.totalorder %s25, 2
      %p81 = por %p79, %p80
      %p83 = scmp.ne.s32.totalorder %s68, %s82
      %p84 = scmp.eq.s32.totalorder %s25, 0
      %p85 = por %p83, %p84
      %s87 = sadd.s32 %s86, 1
      %p90 = scmp.eq.s32.totalorder %s19, 2
      %p91 = scmp.ne.s32.totalorder %s86, %s88
      %p92 = scmp.eq.s32.totalorder %s19, 0
      %p93 = por %p91, %p92
      %p94 = scmp.ne.s32.totalorder %s86, %s88
      %p95 = scmp.eq.s32.totalorder %s24, 2
      %p96 = por %p94, %p95
      %p97 = scmp.ne.s32.totalorder %s88, %s89
      %p98 = scmp.eq.s32.totalorder %s24, 0
      %p99 = por %p97, %p98
      %p100 = scmp.ne.s32.totalorder %s88, %s89
      %p101 = scmp.eq.s32.totalorder %s25, 2
      %p102 = por %p100, %p101
      %p104 = scmp.ne.s32.totalorder %s89, %s103
      %p105 = scmp.eq.s32.totalorder %s25, 0
      %p106 = por %p104, %p105
      %s108 = sadd.s32 %s107, 1
      %p111 = scmp.eq.s32.totalorder %s19, 2
      %p112 = scmp.ne.s32.totalorder %s107, %s109
      %p113 = scmp.eq.s32.totalorder %s19, 0
      %p114 = por %p112, %p113
      %p115 = scmp.ne.s32.totalorder %s107, %s109
      %p116 = scmp.eq.s32.totalorder %s24, 2
      %p117 = por %p115, %p116
      %p118 = scmp.ne.s32.totalorder %s109, %s110
      %p119 = scmp.eq.s32.totalorder %s24, 0
      %p120 = por %p118, %p119
      %p121 = scmp.ne.s32.totalorder %s109, %s110
      %p122 = scmp.eq.s32.totalorder %s25, 2
      %p123 = por %p121, %p122
      %p125 = scmp.ne.s32.totalorder %s110, %s124
      %p126 = scmp.eq.s32.totalorder %s25, 0
      %p127 = por %p125, %p126
      %s129 = sadd.s32 %s128, 1
      %p132 = scmp.eq.s32.totalorder %s19, 2
      %p133 = scmp.ne.s32.totalorder %s128, %s130
      %p134 = scmp.eq.s32.totalorder %s19, 0
      %p135 = por %p133, %p134
      %p136 = scmp.ne.s32.totalorder %s128, %s130
      %p137 = scmp.eq.s32.totalorder %s24, 2
      %p138 = por %p136, %p137
      %p139 = scmp.ne.s32.totalorder %s130, %s131
      %p140 = scmp.eq.s32.totalorder %s24, 0
      %p141 = por %p139, %p140
      %p142 = scmp.ne.s32.totalorder %s130, %s131
      %p143 = scmp.eq.s32.totalorder %s25, 2
      %p144 = por %p142, %p143
      %p146 = scmp.ne.s32.totalorder %s131, %s145
      %p147 = scmp.eq.s32.totalorder %s25, 0
      %p148 = por %p146, %p147
      %s150 = sadd.s32 %s149, 1
      %p153 = scmp.eq.s32.totalorder %s19, 2
      %p154 = scmp.ne.s32.totalorder %s149, %s151
      %p155 = scmp.eq.s32.totalorder %s19, 0
      %p156 = por %p154, %p155
      %p157 = scmp.ne.s32.totalorder %s149, %s151
      %p158 = scmp.eq.s32.totalorder %s24, 2
      %p159 = por %p157, %p158
      %p160 = scmp.ne.s32.totalorder %s151, %s152
      %p161 = scmp.eq.s32.totalorder %s24, 0
      %p162 = por %p160, %p161
      %p163 = scmp.ne.s32.totalorder %s151, %s152
      %p164 = scmp.eq.s32.totalorder %s25, 2
      %p165 = por %p163, %p164
      %p167 = scmp.ne.s32.totalorder %s152, %s166
      %p168 = scmp.eq.s32.totalorder %s25, 0
      %p169 = por %p167, %p168
      %s171 = sadd.s32 %s170, 1
      %p174 = scmp.eq.s32.totalorder %s19, 2
      %p175 = scmp.ne.s32.totalorder %s170, %s172
      %p176 = scmp.eq.s32.totalorder %s19, 0
      %p177 = por %p175, %p176
      %p178 = scmp.ne.s32.totalorder %s170, %s172
      %p179 = scmp.eq.s32.totalorder %s24, 2
      %p180 = por %p178, %p179
      %p181 = scmp.ne.s32.totalorder %s172, %s173
      %p182 = scmp.eq.s32.totalorder %s24, 0
      %p183 = por %p181, %p182
      %p184 = scmp.ne.s32.totalorder %s172, %s173
      %p185 = scmp.eq.s32.totalorder %s25, 2
      %p186 = por %p184, %p185
      %p188 = scmp.ne.s32.totalorder %s173, %s187
      %p189 = scmp.eq.s32.totalorder %s25, 0
      %p190 = por %p188, %p189
      %p191 = scmp.eq.s32.totalorder %s26, 2
      %s192 = scalar_select %p191, %s27, 0
      %p193 = scmp.eq.s32.totalorder %s38, 2
      %s194 = scalar_select %p193, %s34, 0
      %s195 = ssub.s32 %s192, %s194
      %p196 = scmp.eq.s32.totalorder %s195, 0
      %s198 = sadd.s32 %s197, 1
      %s199 = scalar_select %p196, %s197, %s198
      %p202 = pneg %p196
      %p203 = scmp.eq.s32.totalorder %s19, 2
      %p204 = por %p202, %p203
      %p205 = scmp.ne.s32.totalorder %s197, %s200
      %p206 = scmp.eq.s32.totalorder %s19, 0
      %p207 = por %p205, %p206
      %p208 = scmp.ne.s32.totalorder %s197, %s200
      %p209 = scmp.eq.s32.totalorder %s24, 2
      %p210 = por %p208, %p209
      %p211 = scmp.ne.s32.totalorder %s200, %s201
      %p212 = scmp.eq.s32.totalorder %s24, 0
      %p213 = por %p211, %p212
      %p214 = scmp.ne.s32.totalorder %s200, %s201
      %p215 = scmp.eq.s32.totalorder %s25, 2
      %p216 = por %p214, %p215
      %p218 = scmp.ne.s32.totalorder %s201, %s217
      %p219 = scmp.eq.s32.totalorder %s25, 0
      %p220 = por %p218, %p219
      %p221 = scmp.le.s32.totalorder 1, %s19
      %p222 = scmp.lt.s32.totalorder %s19, 4
      %p223 = pnand %p221, %p222
      %p224 = pneg %p223
      // Predicated region
      $region9: #{tpu_custom_call.1} parent=5 // pred_check
        _
      $region10: #{tpu_custom_call.1} parent=5 // pred_check_branch
        %226 = sbr.rel (%p223) target = $region12
      $region11: #{tpu_custom_call.1} parent=5 // pred_region
        %s227 = ssub.s32 %s19, 1
        // Predicated region
        $region13: #{tpu_custom_call.1} parent=11 // pred_check
          %p228 = pneg %p57
        $region14: #{tpu_custom_call.1} parent=11 // pred_check_branch
          %230 = sbr.rel (%p228) target = $region16
        $region15: #{tpu_custom_call.1} parent=11 // pred_region
          %s232 = ssub.s32 128, 128
          %233 = vsyncadd [#allocation4], %s232
          %s234 = smul.addr %s29, 128
          %s235 = scalar_lea.hbm %s0, %s234
          %s237 = sshll.u32 [#allocation3], 4
          %s238 = int_to_ptr.vmem [resolvable:$true] %s237
          %240 = dma.hbm_to_vmem [thread:$0]  %s235, 128, %s238, [#allocation4]
        $region16: #{tpu_custom_call.1} parent=11 // pred_fallthru
          _
        // Predicated region
        $region17: #{tpu_custom_call.1} parent=11 // pred_check
          %p241 = pneg %p78
        $region18: #{tpu_custom_call.1} parent=11 // pred_check_branch
          %243 = sbr.rel (%p241) target = $region20
        $region19: #{tpu_custom_call.1} parent=11 // pred_region
          %s245 = ssub.s32 256, 256
          %246 = vsyncadd [#allocation7], %s245
          %s247 = sshll.u32 [#allocation6], 4
          %s248 = int_to_ptr.vmem [resolvable:$true] %s247
          %253 = dma.hbm_to_vmem [thread:$0]  %s1, 256, %s248, [#allocation7], 128, 128, 8
        $region20: #{tpu_custom_call.1} parent=11 // pred_fallthru
          _
        // Predicated region
        $region21: #{tpu_custom_call.1} parent=11 // pred_check
          %p254 = pneg %p99
        $region22: #{tpu_custom_call.1} parent=11 // pred_check_branch
          %256 = sbr.rel (%p254) target = $region24
        $region23: #{tpu_custom_call.1} parent=11 // pred_region
          _
        $region24: #{tpu_custom_call.1} parent=11 // pred_fallthru
          _
        // Predicated region
        $region25: #{tpu_custom_call.1} parent=11 // pred_check
          %p257 = pneg %p120
        $region26: #{tpu_custom_call.1} parent=11 // pred_check_branch
          %259 = sbr.rel (%p257) target = $region28
        $region27: #{tpu_custom_call.1} parent=11 // pred_region
          %s261 = ssub.s32 512, 512
          %262 = vsyncadd [#allocation7], %s261
          %s263 = sshll.u32 [#allocation8], 4
          %s264 = int_to_ptr.vmem [resolvable:$true] %s263
          %269 = dma.hbm_to_vmem [thread:$0]  %s3, 512, %s264, [#allocation7], 128, 128, 8
        $region28: #{tpu_custom_call.1} parent=11 // pred_fallthru
          _
        // Predicated region
        $region29: #{tpu_custom_call.1} parent=11 // pred_check
          %p270 = pneg %p141
        $region30: #{tpu_custom_call.1} parent=11 // pred_check_branch
          %272 = sbr.rel (%p270) target = $region32
        $region31: #{tpu_custom_call.1} parent=11 // pred_region
          _
        $region32: #{tpu_custom_call.1} parent=11 // pred_fallthru
          _
        // Predicated region
        $region33: #{tpu_custom_call.1} parent=11 // pred_check
          %p273 = pneg %p162
        $region34: #{tpu_custom_call.1} parent=11 // pred_check_branch
          %275 = sbr.rel (%p273) target = $region36
        $region35: #{tpu_custom_call.1} parent=11 // pred_region
          %s277 = ssub.s32 512, 512
          %278 = vsyncadd [#allocation10], %s277
          %s279 = sshll.u32 [#allocation9], 4
          %s280 = int_to_ptr.vmem [resolvable:$true] %s279
          %285 = dma.hbm_to_vmem [thread:$0]  %s5, 512, %s280, [#allocation10], 128, 128, 8
        $region36: #{tpu_custom_call.1} parent=11 // pred_fallthru
          _
        // Predicated region
        $region37: #{tpu_custom_call.1} parent=11 // pred_check
          %p286 = pneg %p183
        $region38: #{tpu_custom_call.1} parent=11 // pred_check_branch
          %288 = sbr.rel (%p286) target = $region40
        $region39: #{tpu_custom_call.1} parent=11 // pred_region
          _
        $region40: #{tpu_custom_call.1} parent=11 // pred_fallthru
          _
      $region12: #{tpu_custom_call.1} parent=5 // pred_fallthru
        _
      %p289 = scmp.lt.s32.totalorder %s19, 3
      // Predicated region
      $region41: #{tpu_custom_call.1} parent=5 // pred_check
        %p290 = pneg %p289
      $region42: #{tpu_custom_call.1} parent=5 // pred_check_branch
        %292 = sbr.rel (%p290) target = $region44
      $region43: #{tpu_custom_call.1} parent=5 // pred_region
        _
      $region44: #{tpu_custom_call.1} parent=5 // pred_fallthru
        _
      %p293 = scmp.le.s32.totalorder 1, %s19
      %p294 = scmp.lt.s32.totalorder %s19, 4
      %p295 = pnand %p293, %p294
      %p296 = pneg %p295
      // Predicated region
      $region45: #{tpu_custom_call.1} parent=5 // pred_check
        _
      $region46: #{tpu_custom_call.1} parent=5 // pred_check_branch
        %298 = sbr.rel (%p295) target = $region48
      $region47: #{tpu_custom_call.1} parent=5 // pred_region
        %s299 = ssub.s32 %s19, 1
        // Predicated region
        $region49: #{tpu_custom_call.1} parent=47 // pred_check
          %p300 = pneg %p57
        $region50: #{tpu_custom_call.1} parent=47 // pred_check_branch
          %302 = sbr.rel (%p300) target = $region52
        $region51: #{tpu_custom_call.1} parent=47 // pred_region
          %303 = dma.done [#allocation4], 128
        $region52: #{tpu_custom_call.1} parent=47 // pred_fallthru
          _
        // Predicated region
        $region53: #{tpu_custom_call.1} parent=47 // pred_check
          %p304 = pneg %p78
        $region54: #{tpu_custom_call.1} parent=47 // pred_check_branch
          %306 = sbr.rel (%p304) target = $region56
        $region55: #{tpu_custom_call.1} parent=47 // pred_region
          %307 = dma.done [#allocation7], 256
        $region56: #{tpu_custom_call.1} parent=47 // pred_fallthru
          _
        // Predicated region
        $region57: #{tpu_custom_call.1} parent=47 // pred_check
          %p308 = pneg %p120
        $region58: #{tpu_custom_call.1} parent=47 // pred_check_branch
          %310 = sbr.rel (%p308) target = $region60
        $region59: #{tpu_custom_call.1} parent=47 // pred_region
          %311 = dma.done [#allocation7], 512
        $region60: #{tpu_custom_call.1} parent=47 // pred_fallthru
          _
        // Predicated region
        $region61: #{tpu_custom_call.1} parent=47 // pred_check
          %p312 = pneg %p162
        $region62: #{tpu_custom_call.1} parent=47 // pred_check_branch
          %314 = sbr.rel (%p312) target = $region64
        $region63: #{tpu_custom_call.1} parent=47 // pred_region
          %315 = dma.done [#allocation10], 512
        $region64: #{tpu_custom_call.1} parent=47 // pred_fallthru
          _
        %p316 = pneg %p57
        %p317 = pneg %p54
        %p318 = pneg %p78
        %p319 = pneg %p75
        %p320 = pneg %p99
        %p321 = pneg %p96
        %p322 = pneg %p120
        %p323 = pneg %p117
        %p324 = pneg %p141
        %p325 = pneg %p138
        %p326 = pneg %p162
        %p327 = pneg %p159
        %p328 = pneg %p183
        %p329 = pneg %p180
        %p330 = pneg %p213
        %p331 = pneg %p210
        %s332 = sand.u32 %s200, 1
        %s333 = scalar_lea.sflag [#allocation5], %s332
        %s334 = sand.u32 %s200, 1
        %s335 = smul.addr %s334, 8
        %s336 = scalar_lea.vmem [#allocation11], %s335
        %p337 = scmp.eq.s32.totalorder %s28, 2
        %s338 = scalar_select %p337, %s29, 0
        %p339 = scmp.eq.s32.totalorder %s28, 0
        %p340 = scmp.eq.s32.totalorder %s29, 0
        %p341 = pnand %p339, %p340
        %p342 = pneg %p341
        // Predicated region
        $region65: #{tpu_custom_call.1} parent=47 // pred_check
          _
        $region66: #{tpu_custom_call.1} parent=47 // pred_check_branch
          %344 = sbr.rel (%p341) target = $region68
        $region67: #{tpu_custom_call.1} parent=47 // pred_region
          %vm345 = vcmask 261120
          %346 = vst.msk [vmem:[#allocation2] sm:$0xff] %vm345, 0.0
        $region68: #{tpu_custom_call.1} parent=47 // pred_fallthru
          _
        %v347 = vld [vmem:[#allocation3] sm:$0xff]
        // Predicated region
        $region69: #{tpu_custom_call.1} parent=47 // pred_check
          %p348 = pneg %p339
        $region70: #{tpu_custom_call.1} parent=47 // pred_check_branch
          %350 = sbr.rel (%p348) target = $region72
        $region71: #{tpu_custom_call.1} parent=47 // pred_region
          %v351 = vld [vmem:[#allocation6] sm:$0xff]
          %v352 = vld [vmem:[#allocation6 + $0x8] sm:$0xff]
          %v353 = vld [vmem:[%s2] sm:$0x1]
          %v355 = vlaneseq
          %v356 = vshrl.u32 %v355, 7
          %v357 = vsub.s32 0, %v356
          %v358 = vrot.slane %v353, %v357
          %vm360 = vcmask 130048
          %v362 = vsel %vm360, %v347, 0
          %364 = vmatprep.subr.mxu0 0.0
          %365 = vmatpush1.msra.mxu0 0.0
          %366 = vmatprep.subr.mxu0 0.0
          %367 = vmatpush1.msra.mxu0 0.0
          %368 = vmatprep.subr.mxu0 0.0
          %369 = vmatpush1.msra.mxu0 0.0
          %370 = vmatprep.subr.mxu0 0.0
          %371 = vmatpush1.msra.mxu0 0.0
          %372 = vmatprep.subr.mxu0 0.0
          %373 = vmatpush1.msra.mxu0 0.0
          %374 = vmatprep.subr.mxu0 0.0
          %375 = vmatpush1.msra.mxu0 0.0
          %376 = vmatprep.subr.mxu0 0.0
          %377 = vmatpush1.msra.mxu0 0.0
          %378 = vmatprep.subr.mxu0 0.0
          %379 = vmatpush1.msra.mxu0 0.0
          %380 = vmatprep.subr.mxu0 0.0
          %381 = vmatpush1.msra.mxu0 0.0
          %382 = vmatprep.subr.mxu0 0.0
          %383 = vmatpush1.msra.mxu0 0.0
          %384 = vmatprep.subr.mxu0 0.0
          %385 = vmatpush1.msra.mxu0 0.0
          %386 = vmatprep.subr.mxu0 0.0
          %387 = vmatpush1.msra.mxu0 0.0
          %388 = vmatprep.subr.mxu0 0.0
          %389 = vmatpush1.msra.mxu0 0.0
          %390 = vmatprep.subr.mxu0 0.0
          %391 = vmatpush1.msra.mxu0 0.0
          %392 = vmatprep.subr.mxu0 0.0
          %393 = vmatpush1.msra.mxu0 %v352
          %394 = vmatprep.subr.mxu0 0.0
          %395 = vmatpush1.msra.mxu0 %v351
          %396 = vmatprep.subr.mxu0 0.0
          %397 = vmatpush2.msra.mxu0 0.0
          %398 = vmatprep.subr.mxu0 0.0
          %399 = vmatpush2.msra.mxu0 0.0
          %400 = vmatprep.subr.mxu0 0.0
          %401 = vmatpush2.msra.mxu0 0.0
          %402 = vmatprep.subr.mxu0 0.0
          %403 = vmatpush2.msra.mxu0 0.0
          %404 = vmatprep.subr.mxu0 0.0
          %405 = vmatpush2.msra.mxu0 0.0
          %406 = vmatprep.subr.mxu0 0.0
          %407 = vmatpush2.msra.mxu0 0.0
          %408 = vmatprep.subr.mxu0 0.0
          %409 = vmatpush2.msra.mxu0 0.0
          %410 = vmatprep.subr.mxu0 0.0
          %411 = vmatpush2.msra.mxu0 0.0
          %412 = vmatprep.subr.mxu0 0.0
          %413 = vmatpush2.msra.mxu0 0.0
          %414 = vmatprep.subr.mxu0 0.0
          %415 = vmatpush2.msra.mxu0 0.0
          %416 = vmatprep.subr.mxu0 0.0
          %417 = vmatpush2.msra.mxu0 0.0
          %418 = vmatprep.subr.mxu0 0.0
          %419 = vmatpush2.msra.mxu0 0.0
          %420 = vmatprep.subr.mxu0 0.0
          %421 = vmatpush2.msra.mxu0 0.0
          %422 = vmatprep.subr.mxu0 0.0
          %423 = vmatpush2.msra.mxu0 0.0
          %424 = vmatprep.subr.mxu0 0.0
          %425 = vmatpush2.msra.mxu0 0.0
          %426 = vmatprep.subr.mxu0 0.0
          %427 = vmatpush2.msra.mxu0 0.0
          %428 = vmatprep.mubr.f32.mxu0 0.0
          %429 = vmatmul.mubr.f32.gmra.mxu0 %v362
          %v430 = vpop.f32.mrf.mxu0
          %v431 = vadd.f32 %v358, %v430
          %v432 = vpop.f32.mrf.mxu0
          %433 = vdwg.mxu0
          %v434 = vmax.f32 %v431, 0.0
          %s435 = smul.u32 %s29, 8
          %v436 = vlaneseq
          %v437 = vshrl.u32 %v436, 7
          %v438 = vstv %s435
          %v439 = vadd.s32 %v438, %v437
          %vm440 = vcmp.lt.s32.totalorder %v439, 8
          %v441 = vsel %vm440, 1, 0
          %vm442 = vcmp.eq.s32.totalorder %v441, 1
          %v443 = vsel %vm442, %v434, 0.0
          %v444 = vld [vmem:[#allocation2] sm:$0x1]
          %vm445 = vcmask 261120
          %v446 = vsel %vm445, %v443, 0.0
          %v447 = vrot.slane %v446, 4
          %v448 = vadd.f32 %v446, %v447
          %v449 = vrot.slane %v448, 2
          %v450 = vadd.f32 %v448, %v449
          %v451 = vrot.slane %v450, 1
          %v452 = vadd.f32 %v450, %v451
          %v453 = vadd.f32 %v444, %v452
          %vm454 = vcmask 253952
          %455 = vst.msk [vmem:[#allocation2] sm:$0x1] %vm454, %v453
          %v456 = vld [vmem:[#allocation2 + $0x1] sm:$0x1]
          %v457 = vmul.f32 %v443, %v443
          %v458 = vsel %vm445, %v457, 0.0
          %v459 = vrot.slane %v458, 4
          %v460 = vadd.f32 %v458, %v459
          %v461 = vrot.slane %v460, 2
          %v462 = vadd.f32 %v460, %v461
          %v463 = vrot.slane %v462, 1
          %v464 = vadd.f32 %v462, %v463
          %v465 = vadd.f32 %v456, %v464
          %466 = vst.msk [vmem:[#allocation2 + $0x1] sm:$0x1] %vm454, %v465
        $region72: #{tpu_custom_call.1} parent=47 // pred_fallthru
          _
        %p467 = scmp.eq.s32.totalorder %s28, 1
        %p468 = pnand %p467, %p340
        %p469 = pneg %p468
        // Predicated region
        $region73: #{tpu_custom_call.1} parent=47 // pred_check
          _
        $region74: #{tpu_custom_call.1} parent=47 // pred_check_branch
          %471 = sbr.rel (%p468) target = $region76
        $region75: #{tpu_custom_call.1} parent=47 // pred_region
          %v472 = vld [vmem:[#allocation2] sm:$0x1]
          %v473 = vmul.f32 %v472, 0.125
          %v474 = vld [vmem:[#allocation2 + $0x1] sm:$0x1]
          %v475 = vmul.f32 %v474, 0.125
          %v476 = vmul.f32 %v473, %v473
          %v477 = vsub.f32 %v475, %v476
          %v478 = vmax.f32 %v477, 0.0
          %vm479 = vcmask 253952
          %480 = vst.msk [vmem:[#allocation2 + $0x4] sm:$0x1] %vm479, %v473
          %v481 = vadd.f32 %v478, 1e-05
          %v482 = vrsqrt.pop %v481
          %483 = vst.msk [vmem:[#allocation2 + $0x5] sm:$0x1] %vm479, %v482
        $region76: #{tpu_custom_call.1} parent=47 // pred_fallthru
          _
        // Predicated region
        $region77: #{tpu_custom_call.1} parent=47 // pred_check
          %p484 = pneg %p467
        $region78: #{tpu_custom_call.1} parent=47 // pred_check_branch
          %486 = sbr.rel (%p484) target = $region80
        $region79: #{tpu_custom_call.1} parent=47 // pred_region
          %v487 = vld [vmem:[#allocation6] sm:$0xff]
          %v488 = vld [vmem:[#allocation6 + $0x8] sm:$0xff]
          %v489 = vld [vmem:[%s2] sm:$0x1]
          %v491 = vlaneseq
          %v492 = vshrl.u32 %v491, 7
          %v493 = vsub.s32 0, %v492
          %v494 = vrot.slane %v489, %v493
          %vm496 = vcmask 130048
          %v498 = vsel %vm496, %v347, 0
          %500 = vmatprep.subr.mxu0 0.0
          %501 = vmatpush1.msra.mxu0 0.0
          %502 = vmatprep.subr.mxu0 0.0
          %503 = vmatpush1.msra.mxu0 0.0
          %504 = vmatprep.subr.mxu0 0.0
          %505 = vmatpush1.msra.mxu0 0.0
          %506 = vmatprep.subr.mxu0 0.0
          %507 = vmatpush1.msra.mxu0 0.0
          %508 = vmatprep.subr.mxu0 0.0
          %509 = vmatpush1.msra.mxu0 0.0
          %510 = vmatprep.subr.mxu0 0.0
          %511 = vmatpush1.msra.mxu0 0.0
          %512 = vmatprep.subr.mxu0 0.0
          %513 = vmatpush1.msra.mxu0 0.0
          %514 = vmatprep.subr.mxu0 0.0
          %515 = vmatpush1.msra.mxu0 0.0
          %516 = vmatprep.subr.mxu0 0.0
          %517 = vmatpush1.msra.mxu0 0.0
          %518 = vmatprep.subr.mxu0 0.0
          %519 = vmatpush1.msra.mxu0 0.0
          %520 = vmatprep.subr.mxu0 0.0
          %521 = vmatpush1.msra.mxu0 0.0
          %522 = vmatprep.subr.mxu0 0.0
          %523 = vmatpush1.msra.mxu0 0.0
          %524 = vmatprep.subr.mxu0 0.0
          %525 = vmatpush1.msra.mxu0 0.0
          %526 = vmatprep.subr.mxu0 0.0
          %527 = vmatpush1.msra.mxu0 0.0
          %528 = vmatprep.subr.mxu0 0.0
          %529 = vmatpush1.msra.mxu0 %v488
          %530 = vmatprep.subr.mxu0 0.0
          %531 = vmatpush1.msra.mxu0 %v487
          %532 = vmatprep.subr.mxu0 0.0
          %533 = vmatpush2.msra.mxu0 0.0
          %534 = vmatprep.subr.mxu0 0.0
          %535 = vmatpush2.msra.mxu0 0.0
          %536 = vmatprep.subr.mxu0 0.0
          %537 = vmatpush2.msra.mxu0 0.0
          %538 = vmatprep.subr.mxu0 0.0
          %539 = vmatpush2.msra.mxu0 0.0
          %540 = vmatprep.subr.mxu0 0.0
          %541 = vmatpush2.msra.mxu0 0.0
          %542 = vmatprep.subr.mxu0 0.0
          %543 = vmatpush2.msra.mxu0 0.0
          %544 = vmatprep.subr.mxu0 0.0
          %545 = vmatpush2.msra.mxu0 0.0
          %546 = vmatprep.subr.mxu0 0.0
          %547 = vmatpush2.msra.mxu0 0.0
          %548 = vmatprep.subr.mxu0 0.0
          %549 = vmatpush2.msra.mxu0 0.0
          %550 = vmatprep.subr.mxu0 0.0
          %551 = vmatpush2.msra.mxu0 0.0
          %552 = vmatprep.subr.mxu0 0.0
          %553 = vmatpush2.msra.mxu0 0.0
          %554 = vmatprep.subr.mxu0 0.0
          %555 = vmatpush2.msra.mxu0 0.0
          %556 = vmatprep.subr.mxu0 0.0
          %557 = vmatpush2.msra.mxu0 0.0
          %558 = vmatprep.subr.mxu0 0.0
          %559 = vmatpush2.msra.mxu0 0.0
          %560 = vmatprep.subr.mxu0 0.0
          %561 = vmatpush2.msra.mxu0 0.0
          %562 = vmatprep.subr.mxu0 0.0
          %563 = vmatpush2.msra.mxu0 0.0
          %564 = vmatprep.mubr.f32.mxu0 0.0
          %565 = vmatmul.mubr.f32.gmra.mxu0 %v498
          %v566 = vpop.f32.mrf.mxu0
          %v567 = vadd.f32 %v494, %v566
          %v568 = vpop.f32.mrf.mxu0
          %569 = vdwg.mxu0
          %v570 = vmax.f32 %v567, 0.0
          %v571 = vld [vmem:[#allocation2 + $0x4] sm:$0x1]
          %v572 = vlaneseq
          %v573 = vshrl.u32 %v572, 7
          %v574 = vsub.s32 0, %v573
          %v575 = vrot.slane %v571, %v574
          %v576 = vsub.f32 %v570, %v575
          %v577 = vld [vmem:[#allocation2 + $0x5] sm:$0x1]
          %v578 = vlaneseq
          %v579 = vshrl.u32 %v578, 7
          %v580 = vsub.s32 0, %v579
          %v581 = vrot.slane %v577, %v580
          %v582 = vmul.f32 %v576, %v581
          %v583 = vld [vmem:[#allocation8] sm:$0xff]
          %v584 = vld [vmem:[#allocation8 + $0x8] sm:$0xff]
          %v585 = vld [vmem:[#allocation8 + $0x10] sm:$0xff]
          %v586 = vld [vmem:[#allocation8 + $0x18] sm:$0xff]
          %v587 = vld [vmem:[%s4] sm:$0x1]
          %v589 = vlaneseq
          %v590 = vshrl.u32 %v589, 7
          %v591 = vsub.s32 0, %v590
          %v592 = vrot.slane %v587, %v591
          %vm594 = vcmask 261120
          %v596 = vsel %vm594, %v582, 0
          %598 = vmatprep.subr.mxu0 0.0
          %599 = vmatpush1.msra.mxu0 0.0
          %600 = vmatprep.subr.mxu0 0.0
          %601 = vmatpush1.msra.mxu0 0.0
          %602 = vmatprep.subr.mxu0 0.0
          %603 = vmatpush1.msra.mxu0 0.0
          %604 = vmatprep.subr.mxu0 0.0
          %605 = vmatpush1.msra.mxu0 0.0
          %606 = vmatprep.subr.mxu0 0.0
          %607 = vmatpush1.msra.mxu0 0.0
          %608 = vmatprep.subr.mxu0 0.0
          %609 = vmatpush1.msra.mxu0 0.0
          %610 = vmatprep.subr.mxu0 0.0
          %611 = vmatpush1.msra.mxu0 0.0
          %612 = vmatprep.subr.mxu0 0.0
          %613 = vmatpush1.msra.mxu0 0.0
          %614 = vmatprep.subr.mxu0 0.0
          %615 = vmatpush1.msra.mxu0 0.0
          %616 = vmatprep.subr.mxu0 0.0
          %617 = vmatpush1.msra.mxu0 0.0
          %618 = vmatprep.subr.mxu0 0.0
          %619 = vmatpush1.msra.mxu0 0.0
          %620 = vmatprep.subr.mxu0 0.0
          %621 = vmatpush1.msra.mxu0 0.0
          %622 = vmatprep.subr.mxu0 0.0
          %623 = vmatpush1.msra.mxu0 %v586
          %624 = vmatprep.subr.mxu0 0.0
          %625 = vmatpush1.msra.mxu0 %v585
          %626 = vmatprep.subr.mxu0 0.0
          %627 = vmatpush1.msra.mxu0 %v584
          %628 = vmatprep.subr.mxu0 0.0
          %629 = vmatpush1.msra.mxu0 %v583
          %630 = vmatprep.subr.mxu0 0.0
          %631 = vmatpush2.msra.mxu0 0.0
          %632 = vmatprep.subr.mxu0 0.0
          %633 = vmatpush2.msra.mxu0 0.0
          %634 = vmatprep.subr.mxu0 0.0
          %635 = vmatpush2.msra.mxu0 0.0
          %636 = vmatprep.subr.mxu0 0.0
          %637 = vmatpush2.msra.mxu0 0.0
          %638 = vmatprep.subr.mxu0 0.0
          %639 = vmatpush2.msra.mxu0 0.0
          %640 = vmatprep.subr.mxu0 0.0
          %641 = vmatpush2.msra.mxu0 0.0
          %642 = vmatprep.subr.mxu0 0.0
          %643 = vmatpush2.msra.mxu0 0.0
          %644 = vmatprep.subr.mxu0 0.0
          %645 = vmatpush2.msra.mxu0 0.0
          %646 = vmatprep.subr.mxu0 0.0
          %647 = vmatpush2.msra.mxu0 0.0
          %648 = vmatprep.subr.mxu0 0.0
          %649 = vmatpush2.msra.mxu0 0.0
          %650 = vmatprep.subr.mxu0 0.0
          %651 = vmatpush2.msra.mxu0 0.0
          %652 = vmatprep.subr.mxu0 0.0
          %653 = vmatpush2.msra.mxu0 0.0
          %654 = vmatprep.subr.mxu0 0.0
          %655 = vmatpush2.msra.mxu0 0.0
          %656 = vmatprep.subr.mxu0 0.0
          %657 = vmatpush2.msra.mxu0 0.0
          %658 = vmatprep.subr.mxu0 0.0
          %659 = vmatpush2.msra.mxu0 0.0
          %660 = vmatprep.subr.mxu0 0.0
          %661 = vmatpush2.msra.mxu0 0.0
          %662 = vmatprep.mubr.f32.mxu0 0.0
          %663 = vmatmul.mubr.f32.gmra.mxu0 %v596
          %v664 = vpop.f32.mrf.mxu0
          %v665 = vadd.f32 %v592, %v664
          %v666 = vpop.f32.mrf.mxu0
          %667 = vdwg.mxu0
          %v668 = vmax.f32 %v665, 0.0
          %s669 = smul.u32 %s29, 8
          %v670 = vlaneseq
          %v671 = vshrl.u32 %v670, 7
          %v672 = vstv %s669
          %v673 = vadd.s32 %v672, %v671
          %vm674 = vcmp.lt.s32.totalorder %v673, 8
          %v675 = vsel %vm674, 1, 0
          %vm676 = vcmp.eq.s32.totalorder %v675, 1
          %v677 = vsel %vm676, %v668, 0.0
          %v678 = vld [vmem:[#allocation2 + $0x2] sm:$0x1]
          %v679 = vsel %vm594, %v677, 0.0
          %v680 = vrot.slane %v679, 4
          %v681 = vadd.f32 %v679, %v680
          %v682 = vrot.slane %v681, 2
          %v683 = vadd.f32 %v681, %v682
          %v684 = vrot.slane %v683, 1
          %v685 = vadd.f32 %v683, %v684
          %v686 = vadd.f32 %v678, %v685
          %vm687 = vcmask 253952
          %688 = vst.msk [vmem:[#allocation2 + $0x2] sm:$0x1] %vm687, %v686
          %v689 = vld [vmem:[#allocation2 + $0x3] sm:$0x1]
          %v690 = vmul.f32 %v677, %v677
          %v691 = vsel %vm594, %v690, 0.0
          %v692 = vrot.slane %v691, 4
          %v693 = vadd.f32 %v691, %v692
          %v694 = vrot.slane %v693, 2
          %v695 = vadd.f32 %v693, %v694
          %v696 = vrot.slane %v695, 1
          %v697 = vadd.f32 %v695, %v696
          %v698 = vadd.f32 %v689, %v697
          %699 = vst.msk [vmem:[#allocation2 + $0x3] sm:$0x1] %vm687, %v698
        $region80: #{tpu_custom_call.1} parent=47 // pred_fallthru
          _
        %p700 = scmp.eq.s32.totalorder %s28, 2
        %p701 = pnand %p700, %p340
        %p702 = pneg %p701
        // Predicated region
        $region81: #{tpu_custom_call.1} parent=47 // pred_check
          _
        $region82: #{tpu_custom_call.1} parent=47 // pred_check_branch
          %704 = sbr.rel (%p701) target = $region84
        $region83: #{tpu_custom_call.1} parent=47 // pred_region
          %v705 = vld [vmem:[#allocation2 + $0x2] sm:$0x1]
          %v706 = vmul.f32 %v705, 0.125
          %v707 = vld [vmem:[#allocation2 + $0x3] sm:$0x1]
          %v708 = vmul.f32 %v707, 0.125
          %v709 = vmul.f32 %v706, %v706
          %v710 = vsub.f32 %v708, %v709
          %v711 = vmax.f32 %v710, 0.0
          %vm712 = vcmask 253952
          %713 = vst.msk [vmem:[#allocation2 + $0x6] sm:$0x1] %vm712, %v706
          %v714 = vadd.f32 %v711, 1e-05
          %v715 = vrsqrt.pop %v714
          %716 = vst.msk [vmem:[#allocation2 + $0x7] sm:$0x1] %vm712, %v715
        $region84: #{tpu_custom_call.1} parent=47 // pred_fallthru
          _
        // Predicated region
        $region85: #{tpu_custom_call.1} parent=47 // pred_check
          %p717 = pneg %p700
        $region86: #{tpu_custom_call.1} parent=47 // pred_check_branch
          %719 = sbr.rel (%p717) target = $region88
        $region87: #{tpu_custom_call.1} parent=47 // pred_region
          %v720 = vld [vmem:[#allocation6] sm:$0xff]
          %v721 = vld [vmem:[#allocation6 + $0x8] sm:$0xff]
          %v722 = vld [vmem:[%s2] sm:$0x1]
          %v724 = vlaneseq
          %v725 = vshrl.u32 %v724, 7
          %v726 = vsub.s32 0, %v725
          %v727 = vrot.slane %v722, %v726
          %vm729 = vcmask 130048
          %v731 = vsel %vm729, %v347, 0
          %733 = vmatprep.subr.mxu0 0.0
          %734 = vmatpush1.msra.mxu0 0.0
          %735 = vmatprep.subr.mxu0 0.0
          %736 = vmatpush1.msra.mxu0 0.0
          %737 = vmatprep.subr.mxu0 0.0
          %738 = vmatpush1.msra.mxu0 0.0
          %739 = vmatprep.subr.mxu0 0.0
          %740 = vmatpush1.msra.mxu0 0.0
          %741 = vmatprep.subr.mxu0 0.0
          %742 = vmatpush1.msra.mxu0 0.0
          %743 = vmatprep.subr.mxu0 0.0
          %744 = vmatpush1.msra.mxu0 0.0
          %745 = vmatprep.subr.mxu0 0.0
          %746 = vmatpush1.msra.mxu0 0.0
          %747 = vmatprep.subr.mxu0 0.0
          %748 = vmatpush1.msra.mxu0 0.0
          %749 = vmatprep.subr.mxu0 0.0
          %750 = vmatpush1.msra.mxu0 0.0
          %751 = vmatprep.subr.mxu0 0.0
          %752 = vmatpush1.msra.mxu0 0.0
          %753 = vmatprep.subr.mxu0 0.0
          %754 = vmatpush1.msra.mxu0 0.0
          %755 = vmatprep.subr.mxu0 0.0
          %756 = vmatpush1.msra.mxu0 0.0
          %757 = vmatprep.subr.mxu0 0.0
          %758 = vmatpush1.msra.mxu0 0.0
          %759 = vmatprep.subr.mxu0 0.0
          %760 = vmatpush1.msra.mxu0 0.0
          %761 = vmatprep.subr.mxu0 0.0
          %762 = vmatpush1.msra.mxu0 %v721
          %763 = vmatprep.subr.mxu0 0.0
          %764 = vmatpush1.msra.mxu0 %v720
          %765 = vmatprep.subr.mxu0 0.0
          %766 = vmatpush2.msra.mxu0 0.0
          %767 = vmatprep.subr.mxu0 0.0
          %768 = vmatpush2.msra.mxu0 0.0
          %769 = vmatprep.subr.mxu0 0.0
          %770 = vmatpush2.msra.mxu0 0.0
          %771 = vmatprep.subr.mxu0 0.0
          %772 = vmatpush2.msra.mxu0 0.0
          %773 = vmatprep.subr.mxu0 0.0
          %774 = vmatpush2.msra.mxu0 0.0
          %775 = vmatprep.subr.mxu0 0.0
          %776 = vmatpush2.msra.mxu0 0.0
          %777 = vmatprep.subr.mxu0 0.0
          %778 = vmatpush2.msra.mxu0 0.0
          %779 = vmatprep.subr.mxu0 0.0
          %780 = vmatpush2.msra.mxu0 0.0
          %781 = vmatprep.subr.mxu0 0.0
          %782 = vmatpush2.msra.mxu0 0.0
          %783 = vmatprep.subr.mxu0 0.0
          %784 = vmatpush2.msra.mxu0 0.0
          %785 = vmatprep.subr.mxu0 0.0
          %786 = vmatpush2.msra.mxu0 0.0
          %787 = vmatprep.subr.mxu0 0.0
          %788 = vmatpush2.msra.mxu0 0.0
          %789 = vmatprep.subr.mxu0 0.0
          %790 = vmatpush2.msra.mxu0 0.0
          %791 = vmatprep.subr.mxu0 0.0
          %792 = vmatpush2.msra.mxu0 0.0
          %793 = vmatprep.subr.mxu0 0.0
          %794 = vmatpush2.msra.mxu0 0.0
          %795 = vmatprep.subr.mxu0 0.0
          %796 = vmatpush2.msra.mxu0 0.0
          %797 = vmatprep.mubr.f32.mxu0 0.0
          %798 = vmatmul.mubr.f32.gmra.mxu0 %v731
          %v799 = vpop.f32.mrf.mxu0
          %v800 = vadd.f32 %v727, %v799
          %v801 = vpop.f32.mrf.mxu0
          %802 = vdwg.mxu0
          %v803 = vmax.f32 %v800, 0.0
          %v804 = vld [vmem:[#allocation2 + $0x4] sm:$0x1]
          %v805 = vlaneseq
          %v806 = vshrl.u32 %v805, 7
          %v807 = vsub.s32 0, %v806
          %v808 = vrot.slane %v804, %v807
          %v809 = vsub.f32 %v803, %v808
          %v810 = vld [vmem:[#allocation2 + $0x5] sm:$0x1]
          %v811 = vlaneseq
          %v812 = vshrl.u32 %v811, 7
          %v813 = vsub.s32 0, %v812
          %v814 = vrot.slane %v810, %v813
          %v815 = vmul.f32 %v809, %v814
          %v816 = vld [vmem:[#allocation8] sm:$0xff]
          %v817 = vld [vmem:[#allocation8 + $0x8] sm:$0xff]
          %v818 = vld [vmem:[#allocation8 + $0x10] sm:$0xff]
          %v819 = vld [vmem:[#allocation8 + $0x18] sm:$0xff]
          %v820 = vld [vmem:[%s4] sm:$0x1]
          %v822 = vlaneseq
          %v823 = vshrl.u32 %v822, 7
          %v824 = vsub.s32 0, %v823
          %v825 = vrot.slane %v820, %v824
          %vm827 = vcmask 261120
          %v829 = vsel %vm827, %v815, 0
          %831 = vmatprep.subr.mxu0 0.0
          %832 = vmatpush1.msra.mxu0 0.0
          %833 = vmatprep.subr.mxu0 0.0
          %834 = vmatpush1.msra.mxu0 0.0
          %835 = vmatprep.subr.mxu0 0.0
          %836 = vmatpush1.msra.mxu0 0.0
          %837 = vmatprep.subr.mxu0 0.0
          %838 = vmatpush1.msra.mxu0 0.0
          %839 = vmatprep.subr.mxu0 0.0
          %840 = vmatpush1.msra.mxu0 0.0
          %841 = vmatprep.subr.mxu0 0.0
          %842 = vmatpush1.msra.mxu0 0.0
          %843 = vmatprep.subr.mxu0 0.0
          %844 = vmatpush1.msra.mxu0 0.0
          %845 = vmatprep.subr.mxu0 0.0
          %846 = vmatpush1.msra.mxu0 0.0
          %847 = vmatprep.subr.mxu0 0.0
          %848 = vmatpush1.msra.mxu0 0.0
          %849 = vmatprep.subr.mxu0 0.0
          %850 = vmatpush1.msra.mxu0 0.0
          %851 = vmatprep.subr.mxu0 0.0
          %852 = vmatpush1.msra.mxu0 0.0
          %853 = vmatprep.subr.mxu0 0.0
          %854 = vmatpush1.msra.mxu0 0.0
          %855 = vmatprep.subr.mxu0 0.0
          %856 = vmatpush1.msra.mxu0 %v819
          %857 = vmatprep.subr.mxu0 0.0
          %858 = vmatpush1.msra.mxu0 %v818
          %859 = vmatprep.subr.mxu0 0.0
          %860 = vmatpush1.msra.mxu0 %v817
          %861 = vmatprep.subr.mxu0 0.0
          %862 = vmatpush1.msra.mxu0 %v816
          %863 = vmatprep.subr.mxu0 0.0
          %864 = vmatpush2.msra.mxu0 0.0
          %865 = vmatprep.subr.mxu0 0.0
          %866 = vmatpush2.msra.mxu0 0.0
          %867 = vmatprep.subr.mxu0 0.0
          %868 = vmatpush2.msra.mxu0 0.0
          %869 = vmatprep.subr.mxu0 0.0
          %870 = vmatpush2.msra.mxu0 0.0
          %871 = vmatprep.subr.mxu0 0.0
          %872 = vmatpush2.msra.mxu0 0.0
          %873 = vmatprep.subr.mxu0 0.0
          %874 = vmatpush2.msra.mxu0 0.0
          %875 = vmatprep.subr.mxu0 0.0
          %876 = vmatpush2.msra.mxu0 0.0
          %877 = vmatprep.subr.mxu0 0.0
          %878 = vmatpush2.msra.mxu0 0.0
          %879 = vmatprep.subr.mxu0 0.0
          %880 = vmatpush2.msra.mxu0 0.0
          %881 = vmatprep.subr.mxu0 0.0
          %882 = vmatpush2.msra.mxu0 0.0
          %883 = vmatprep.subr.mxu0 0.0
          %884 = vmatpush2.msra.mxu0 0.0
          %885 = vmatprep.subr.mxu0 0.0
          %886 = vmatpush2.msra.mxu0 0.0
          %887 = vmatprep.subr.mxu0 0.0
          %888 = vmatpush2.msra.mxu0 0.0
          %889 = vmatprep.subr.mxu0 0.0
          %890 = vmatpush2.msra.mxu0 0.0
          %891 = vmatprep.subr.mxu0 0.0
          %892 = vmatpush2.msra.mxu0 0.0
          %893 = vmatprep.subr.mxu0 0.0
          %894 = vmatpush2.msra.mxu0 0.0
          %895 = vmatprep.mubr.f32.mxu0 0.0
          %896 = vmatmul.mubr.f32.gmra.mxu0 %v829
          %v897 = vpop.f32.mrf.mxu0
          %v898 = vadd.f32 %v825, %v897
          %v899 = vpop.f32.mrf.mxu0
          %900 = vdwg.mxu0
          %v901 = vmax.f32 %v898, 0.0
          %v902 = vld [vmem:[#allocation2 + $0x6] sm:$0x1]
          %v903 = vlaneseq
          %v904 = vshrl.u32 %v903, 7
          %v905 = vsub.s32 0, %v904
          %v906 = vrot.slane %v902, %v905
          %v907 = vsub.f32 %v901, %v906
          %v908 = vld [vmem:[#allocation2 + $0x7] sm:$0x1]
          %v909 = vlaneseq
          %v910 = vshrl.u32 %v909, 7
          %v911 = vsub.s32 0, %v910
          %v912 = vrot.slane %v908, %v911
          %v913 = vmul.f32 %v907, %v912
          %v914 = vadd.f32 %v913, %v901
          %v915 = vld [vmem:[#allocation9] sm:$0xff]
          %v916 = vld [vmem:[#allocation9 + $0x8] sm:$0xff]
          %v917 = vld [vmem:[#allocation9 + $0x10] sm:$0xff]
          %v918 = vld [vmem:[#allocation9 + $0x18] sm:$0xff]
          %v919 = vld [vmem:[%s6] sm:$0x1]
          %v921 = vlaneseq
          %v922 = vshrl.u32 %v921, 7
          %v923 = vsub.s32 0, %v922
          %v924 = vrot.slane %v919, %v923
          %v927 = vsel %vm827, %v914, 0
          %929 = vmatprep.subr.mxu0 0.0
          %930 = vmatpush1.msra.mxu0 0.0
          %931 = vmatprep.subr.mxu0 0.0
          %932 = vmatpush1.msra.mxu0 0.0
          %933 = vmatprep.subr.mxu0 0.0
          %934 = vmatpush1.msra.mxu0 0.0
          %935 = vmatprep.subr.mxu0 0.0
          %936 = vmatpush1.msra.mxu0 0.0
          %937 = vmatprep.subr.mxu0 0.0
          %938 = vmatpush1.msra.mxu0 0.0
          %939 = vmatprep.subr.mxu0 0.0
          %940 = vmatpush1.msra.mxu0 0.0
          %941 = vmatprep.subr.mxu0 0.0
          %942 = vmatpush1.msra.mxu0 0.0
          %943 = vmatprep.subr.mxu0 0.0
          %944 = vmatpush1.msra.mxu0 0.0
          %945 = vmatprep.subr.mxu0 0.0
          %946 = vmatpush1.msra.mxu0 0.0
          %947 = vmatprep.subr.mxu0 0.0
          %948 = vmatpush1.msra.mxu0 0.0
          %949 = vmatprep.subr.mxu0 0.0
          %950 = vmatpush1.msra.mxu0 0.0
          %951 = vmatprep.subr.mxu0 0.0
          %952 = vmatpush1.msra.mxu0 0.0
          %953 = vmatprep.subr.mxu0 0.0
          %954 = vmatpush1.msra.mxu0 %v918
          %955 = vmatprep.subr.mxu0 0.0
          %956 = vmatpush1.msra.mxu0 %v917
          %957 = vmatprep.subr.mxu0 0.0
          %958 = vmatpush1.msra.mxu0 %v916
          %959 = vmatprep.subr.mxu0 0.0
          %960 = vmatpush1.msra.mxu0 %v915
          %961 = vmatprep.subr.mxu0 0.0
          %962 = vmatpush2.msra.mxu0 0.0
          %963 = vmatprep.subr.mxu0 0.0
          %964 = vmatpush2.msra.mxu0 0.0
          %965 = vmatprep.subr.mxu0 0.0
          %966 = vmatpush2.msra.mxu0 0.0
          %967 = vmatprep.subr.mxu0 0.0
          %968 = vmatpush2.msra.mxu0 0.0
          %969 = vmatprep.subr.mxu0 0.0
          %970 = vmatpush2.msra.mxu0 0.0
          %971 = vmatprep.subr.mxu0 0.0
          %972 = vmatpush2.msra.mxu0 0.0
          %973 = vmatprep.subr.mxu0 0.0
          %974 = vmatpush2.msra.mxu0 0.0
          %975 = vmatprep.subr.mxu0 0.0
          %976 = vmatpush2.msra.mxu0 0.0
          %977 = vmatprep.subr.mxu0 0.0
          %978 = vmatpush2.msra.mxu0 0.0
          %979 = vmatprep.subr.mxu0 0.0
          %980 = vmatpush2.msra.mxu0 0.0
          %981 = vmatprep.subr.mxu0 0.0
          %982 = vmatpush2.msra.mxu0 0.0
          %983 = vmatprep.subr.mxu0 0.0
          %984 = vmatpush2.msra.mxu0 0.0
          %985 = vmatprep.subr.mxu0 0.0
          %986 = vmatpush2.msra.mxu0 0.0
          %987 = vmatprep.subr.mxu0 0.0
          %988 = vmatpush2.msra.mxu0 0.0
          %989 = vmatprep.subr.mxu0 0.0
          %990 = vmatpush2.msra.mxu0 0.0
          %991 = vmatprep.subr.mxu0 0.0
          %992 = vmatpush2.msra.mxu0 0.0
          %993 = vmatprep.mubr.f32.mxu0 0.0
          %994 = vmatmul.mubr.f32.gmra.mxu0 %v927
          %v995 = vpop.f32.mrf.mxu0
          %v996 = vadd.f32 %v924, %v995
          %v997 = vpop.f32.mrf.mxu0
          %998 = vdwg.mxu0
          %v999 = vsub.f32 0.0, %v996
          %v1000 = vmul.f32 %v999, 1.442695
          %v1001 = vpow.pop %v1000
          %v1002 = vadd.f32 %v1001, 1.0
          %v1003 = vrcp.pop %v1002
          %vm1004 = vcmask 64512
          %1005 = vst.msk [vmem:[%s336] sm:$0xff] %vm1004, %v1003
        $region88: #{tpu_custom_call.1} parent=47 // pred_fallthru
          _
        %s1006 = sand.u32 %s200, 1
        %s1007 = scalar_lea.sflag [#allocation5], %s1006
        %s1008 = sand.u32 %s200, 1
        %s1009 = smul.addr %s1008, 8
        %s1010 = scalar_lea.vmem [#allocation11], %s1009
        // Predicated region
        $region89: #{tpu_custom_call.1} parent=47 // pred_check
          %p1011 = pneg %p210
        $region90: #{tpu_custom_call.1} parent=47 // pred_check_branch
          %1013 = sbr.rel (%p1011) target = $region92
        $region91: #{tpu_custom_call.1} parent=47 // pred_region
          %p1014 = scmp.eq.s32.totalorder %s28, 2
          %s1015 = scalar_select %p1014, %s29, 0
          %s1017 = ssub.s32 128, 128
          %1018 = vsyncadd %s1007, %s1017
          %s1019 = smul.addr %s1015, 128
          %s1020 = scalar_lea.hbm %s7, %s1019
          %s1022 = sshll.u32 %s1010, 4
          %s1023 = int_to_ptr.vmem [resolvable:$true] %s1022
          %1025 = dma.vmem_to_hbm [thread:$0]  %s1023, 128, %s1020, %s1007
        $region92: #{tpu_custom_call.1} parent=47 // pred_fallthru
          _
      $region48: #{tpu_custom_call.1} parent=5 // pred_fallthru
        _
      %p1026 = scmp.le.s32.totalorder 2, %s19
      // Predicated region
      $region93: #{tpu_custom_call.1} parent=5 // pred_check
        %p1027 = pneg %p1026
      $region94: #{tpu_custom_call.1} parent=5 // pred_check_branch
        %1029 = sbr.rel (%p1027) target = $region96
      $region95: #{tpu_custom_call.1} parent=5 // pred_region
        %s1030 = ssub.s32 %s19, 2
        // Predicated region
        $region97: #{tpu_custom_call.1} parent=95 // pred_check
          %p1031 = pneg %p216
        $region98: #{tpu_custom_call.1} parent=95 // pred_check_branch
          %1033 = sbr.rel (%p1031) target = $region100
        $region99: #{tpu_custom_call.1} parent=95 // pred_region
          %s1034 = sand.u32 %s201, 1
          %s1035 = scalar_lea.sflag [#allocation5], %s1034
          %s1036 = sand.u32 %s201, 1
          %s1037 = smul.addr %s1036, 8
          %s1038 = scalar_lea.vmem [#allocation11], %s1037
          %1039 = dma.done %s1035, 128
        $region100: #{tpu_custom_call.1} parent=95 // pred_fallthru
          _
      $region96: #{tpu_custom_call.1} parent=5 // pred_fallthru
        _
    $region6: #{tpu_custom_call.1} parent=1 // loop_footer
      %s23 = sadd.s32 1, %s19
    $region7: #{tpu_custom_call.1} parent=1 // loop_footer_branch
      %18 = sbr.rel target = $region3
    $region8: #{tpu_custom_call.1} parent=1 // loop_exit
      _
    %1040 = vsyncpa [#allocation4], 1
    %s1041 = scalar_lea.sflag [#allocation4], 1
    %1042 = vsyncpa %s1041, 1
    %1043 = vsyncpa [#allocation7], 1
    %1044 = vsyncpa [#allocation10], 1
    %1045 = vsyncpa [#allocation5], 1
    %s1046 = scalar_lea.sflag [#allocation5], 1
    %1047 = vsyncpa %s1046, 1

</llo_original>
